<compile_context>
chip_gen: v7x
topology: tpu7x:2x2x1
jax: 0.10.0
libtpu: 0.0.40
codegen_flags: <defaults>
</compile_context>

<pallas_src>
import functools

import jax
import jax.numpy as jnp
from jax import lax
from jax.experimental import pallas as pl
from jax.experimental.pallas import tpu as pltpu


_EPS = 1e-5
_DEFAULT_TILE_ROWS = 1024


# ----------------------------------------------------------------------------
# Kernel 1: lane-packed LayerNorm.  Each 128-lane row of the block holds
# G = 128 // C complete feature vectors; per-group statistics come from two
# MXU matmuls with a block-diagonal segment matrix (full-precision f32).
# ----------------------------------------------------------------------------
def _ln_packed_kernel(x_ref, seg_ref, w_ref, b_ref, o_ref, *, inv_c, eps):
    x = x_ref[...]                                   # (tile_r, 128) f32
    seg = seg_ref[...]                               # (128, 128) block-diagonal 0/1
    # per-group sum broadcast back to every lane of the group
    mu = jnp.dot(x, seg,
                 preferred_element_type=jnp.float32,
                 precision=lax.Precision.HIGHEST) * inv_c
    xc = x - mu
    var = jnp.dot(xc * xc, seg,
                  preferred_element_type=jnp.float32,
                  precision=lax.Precision.HIGHEST) * inv_c
    o_ref[...] = xc * lax.rsqrt(var + eps) * w_ref[...] + b_ref[...]


# ----------------------------------------------------------------------------
# Kernel 2: generic fallback — block is (tile_r, C) with C the full feature
# dim; reduction over the lane axis (XLU).
# ----------------------------------------------------------------------------
def _ln_rows_kernel(x_ref, w_ref, b_ref, o_ref, *, inv_c, eps):
    x = x_ref[...]                                   # (tile_r, C) f32
    mu = jnp.sum(x, axis=-1, keepdims=True) * inv_c
    xc = x - mu
    var = jnp.sum(xc * xc, axis=-1, keepdims=True) * inv_c
    o_ref[...] = xc * lax.rsqrt(var + eps) * w_ref[...] + b_ref[...]


def _round_up(a, b):
    return ((a + b - 1) // b) * b


def with_bias_layer_norm(x, weight, bias, *, eps=_EPS,
                         tile_rows=_DEFAULT_TILE_ROWS):
    """WithBias_LayerNorm.forward.  x: (..., C); weight, bias: (C,)."""
    orig_shape = x.shape
    orig_dtype = x.dtype
    C = orig_shape[-1]
    R = 1
    for d in orig_shape[:-1]:
        R *= d

    x2 = x.reshape(R, C).astype(jnp.float32)         # contiguous reshape (free)
    w = weight.astype(jnp.float32)
    b = bias.astype(jnp.float32)
    params = pltpu.CompilerParams(dimension_semantics=("parallel",))

    use_packed = (C < 128) and (128 % C == 0) and ((R * C) % 128 == 0) and R > 0

    if use_packed:
        G = 128 // C                                 # rows packed per 128 lanes
        Rp = R // G
        xp = x2.reshape(Rp, 128)                     # contiguous reshape (free)
        tile = min(tile_rows, Rp)
        Rpad = _round_up(Rp, tile)
        if Rpad != Rp:
            xp = jnp.pad(xp, ((0, Rpad - Rp), (0, 0)))

        lane_grp = jnp.arange(128, dtype=jnp.int32) // C
        seg = (lane_grp[:, None] == lane_grp[None, :]).astype(jnp.float32)
        w_t = jnp.tile(w, G).reshape(1, 128)
        b_t = jnp.tile(b, G).reshape(1, 128)

        out = pl.pallas_call(
            functools.partial(_ln_packed_kernel, inv_c=1.0 / C, eps=eps),
            out_shape=jax.ShapeDtypeStruct((Rpad, 128), jnp.float32),
            grid=(Rpad // tile,),
            in_specs=[
                pl.BlockSpec((tile, 128), lambda i: (i, 0)),
                pl.BlockSpec((128, 128), lambda i: (0, 0)),
                pl.BlockSpec((1, 128), lambda i: (0, 0)),
                pl.BlockSpec((1, 128), lambda i: (0, 0)),
            ],
            out_specs=pl.BlockSpec((tile, 128), lambda i: (i, 0)),
            compiler_params=params,
        )(xp, seg, w_t, b_t)
        out = out[:Rp].reshape(R, C)
    else:
        tile = min(tile_rows, R)
        Rpad = _round_up(R, tile)
        xr = x2 if Rpad == R else jnp.pad(x2, ((0, Rpad - R), (0, 0)))
        out = pl.pallas_call(
            functools.partial(_ln_rows_kernel, inv_c=1.0 / C, eps=eps),
            out_shape=jax.ShapeDtypeStruct((Rpad, C), jnp.float32),
            grid=(Rpad // tile,),
            in_specs=[
                pl.BlockSpec((tile, C), lambda i: (i, 0)),
                pl.BlockSpec((1, C), lambda i: (0, 0)),
                pl.BlockSpec((1, C), lambda i: (0, 0)),
            ],
            out_specs=pl.BlockSpec((tile, C), lambda i: (i, 0)),
            compiler_params=params,
        )(xr, w.reshape(1, C), b.reshape(1, C))
        out = out[:R]

    return out.reshape(orig_shape).astype(orig_dtype)


if __name__ == "__main__":
    key = jax.random.PRNGKey(0)
    k1, k2, k3 = jax.random.split(key, 3)
    # Typical usage of WithBias_LayerNorm: tokens of shape (batch, h*w, channels).
    B, S, C = 2, 16 * 16, 32
    x = jax.random.normal(k1, (B, S, C), dtype=jnp.float32)
    weight = 1.0 + 0.1 * jax.random.normal(k2, (C,), dtype=jnp.float32)
    bias = 0.1 * jax.random.normal(k3, (C,), dtype=jnp.float32)

    fwd = jax.jit(with_bias_layer_norm)
    out = fwd(x, weight, bias)
    jax.block_until_ready(out)

    # Plain-JAX reference (matches the PyTorch forward: unbiased=False, eps=1e-5).
    mu = jnp.mean(x, axis=-1, keepdims=True)
    var = jnp.mean((x - mu) ** 2, axis=-1, keepdims=True)
    ref = (x - mu) / jnp.sqrt(var + 1e-5) * weight + bias

    assert out.shape == x.shape and out.dtype == x.dtype
    max_err = float(jnp.max(jnp.abs(out - ref)))
    assert max_err < 1e-4, max_err
    print("KERNEL_OK")
</pallas_src>

<mosaic_0001>
module attributes {stable_mosaic.version = 11 : i64} {
  func.func @_ln_packed_kernel(%arg0: i32, %arg1: memref<128x128xf32, #tpu.memory_space<vmem>>, %arg2: memref<128x128xf32, #tpu.memory_space<vmem>>, %arg3: memref<1x128xf32, #tpu.memory_space<vmem>>, %arg4: memref<1x128xf32, #tpu.memory_space<vmem>>, %arg5: memref<128x128xf32, #tpu.memory_space<vmem>>) attributes {dimension_semantics = [#tpu.dimension_semantics<parallel>], iteration_bounds = array<i64: 1>, scalar_prefetch = 0 : i64, scratch_operands = 0 : i64, tpu.core_type = #tpu.core_type<tc>, window_params = [{transform_indices = @transform_0, window_bounds = array<i64: 128, 128>}, {pipeline_mode = #tpu.pipeline_mode<synchronous>, transform_indices = @transform_1, window_bounds = array<i64: 128, 128>}, {pipeline_mode = #tpu.pipeline_mode<synchronous>, transform_indices = @transform_2, window_bounds = array<i64: 1, 128>}, {pipeline_mode = #tpu.pipeline_mode<synchronous>, transform_indices = @transform_3, window_bounds = array<i64: 1, 128>}, {transform_indices = @transform_4, window_bounds = array<i64: 128, 128>}]} {
    %c0 = arith.constant 0 : index
    %c0_0 = arith.constant 0 : index
    %0 = vector.load %arg1[%c0, %c0_0] : memref<128x128xf32, #tpu.memory_space<vmem>>, vector<128x128xf32>
    %c0_1 = arith.constant 0 : index
    %c0_2 = arith.constant 0 : index
    %1 = vector.load %arg2[%c0_1, %c0_2] : memref<128x128xf32, #tpu.memory_space<vmem>>, vector<128x128xf32>
    %cst = arith.constant dense<0.000000e+00> : vector<128x128xf32>
    %2 = tpu.matmul %0, %1, %cst {dimension_numbers = #tpu.dot_dimension_numbers<[1], [0], [0], [1], [0, 0, 1, 1], [], []>, precision = #tpu.contract_precision<fp32>} : vector<128x128xf32>, vector<128x128xf32>, vector<128x128xf32> -> vector<128x128xf32>
    %cst_3 = arith.constant 3.125000e-02 : f32
    %3 = vector.broadcast %cst_3 : f32 to vector<128x128xf32>
    %4 = arith.mulf %2, %3 : vector<128x128xf32>
    %5 = arith.subf %0, %4 : vector<128x128xf32>
    %6 = arith.mulf %5, %5 : vector<128x128xf32>
    %cst_4 = arith.constant dense<0.000000e+00> : vector<128x128xf32>
    %7 = tpu.matmul %6, %1, %cst_4 {dimension_numbers = #tpu.dot_dimension_numbers<[1], [0], [0], [1], [0, 0, 1, 1], [], []>, precision = #tpu.contract_precision<fp32>} : vector<128x128xf32>, vector<128x128xf32>, vector<128x128xf32> -> vector<128x128xf32>
    %cst_5 = arith.constant 3.125000e-02 : f32
    %8 = vector.broadcast %cst_5 : f32 to vector<128x128xf32>
    %9 = arith.mulf %7, %8 : vector<128x128xf32>
    %cst_6 = arith.constant 9.99999974E-6 : f32
    %10 = vector.broadcast %cst_6 : f32 to vector<128x128xf32>
    %11 = arith.addf %9, %10 : vector<128x128xf32>
    %12 = math.rsqrt %11 : vector<128x128xf32>
    %13 = arith.mulf %5, %12 : vector<128x128xf32>
    %c0_7 = arith.constant 0 : index
    %c0_8 = arith.constant 0 : index
    %14 = vector.load %arg3[%c0_7, %c0_8] : memref<1x128xf32, #tpu.memory_space<vmem>>, vector<1x128xf32>
    %15 = vector.broadcast %14 : vector<1x128xf32> to vector<128x128xf32>
    %16 = arith.mulf %13, %15 : vector<128x128xf32>
    %c0_9 = arith.constant 0 : index
    %c0_10 = arith.constant 0 : index
    %17 = vector.load %arg4[%c0_9, %c0_10] : memref<1x128xf32, #tpu.memory_space<vmem>>, vector<1x128xf32>
    %18 = vector.broadcast %17 : vector<1x128xf32> to vector<128x128xf32>
    %19 = arith.addf %16, %18 : vector<128x128xf32>
    %c0_11 = arith.constant 0 : index
    %c0_12 = arith.constant 0 : index
    %20 = vector.load %arg5[%c0_11, %c0_12] : memref<128x128xf32, #tpu.memory_space<vmem>>, vector<128x128xf32>
    tpu.vector_store %arg5[%c0_11, %c0_12], %19 {strides = array<i32>} : memref<128x128xf32, #tpu.memory_space<vmem>>, vector<128x128xf32>,
    return
  }
  func.func @transform_0(%arg0: i32) -> (i32, i32) {
    %c0_i32 = arith.constant 0 : i32
    %c0_i32_0 = arith.constant 0 : i32
    return %arg0, %c0_i32 : i32, i32
  }
  func.func @transform_1(%arg0: i32) -> (i32, i32) {
    %c0_i32 = arith.constant 0 : i32
    %c0_i32_0 = arith.constant 0 : i32
    %c0_i32_1 = arith.constant 0 : i32
    return %c0_i32, %c0_i32_0 : i32, i32
  }
  func.func @transform_2(%arg0: i32) -> (i32, i32) {
    %c0_i32 = arith.constant 0 : i32
    %c0_i32_0 = arith.constant 0 : i32
    %c0_i32_1 = arith.constant 0 : i32
    return %c0_i32, %c0_i32_0 : i32, i32
  }
  func.func @transform_3(%arg0: i32) -> (i32, i32) {
    %c0_i32 = arith.constant 0 : i32
    %c0_i32_0 = arith.constant 0 : i32
    %c0_i32_1 = arith.constant 0 : i32
    return %c0_i32, %c0_i32_0 : i32, i32
  }
  func.func @transform_4(%arg0: i32) -> (i32, i32) {
    %c0_i32 = arith.constant 0 : i32
    %c0_i32_0 = arith.constant 0 : i32
    return %arg0, %c0_i32 : i32, i32
  }
}

</mosaic_0001>

<llo_original>
// kernel: tile.13
$region0: #{tile.13}
  #allocation0 [shape = 's32[1]{0}', space=sflag, size = 0x4, scoped, tag = 'scoped memory for tile.13']
  %s0 = inlined_call_operand.vmem [shape: f32[32], index: 0, kind: input, shape index: {}]
  %s1 = inlined_call_operand.vmem [shape: f32[4,32], index: 1, kind: output, shape index: {}]
  // Predicated region
  $region2: #{tile.13} parent=0 // pred_check
    _
  $region3: #{tile.13} parent=0 // pred_check_branch
    %3 = sbr.rel (0) target = $region5
  $region4: #{tile.13} parent=0 // pred_region
    _
  $region5: #{tile.13} parent=0 // pred_fallthru
    _
  %v4 = vld [vmem:[%s0] ss:$0 sm:$0xff]
  %5 = vst [vmem:[%s1] sm:$0xf] %v4

// kernel: tile.14
$region0: #{tile.14}
  %s0 = inlined_call_operand.vmem [shape: f32[4,32], index: 0, kind: input, shape index: {}]
  %s1 = inlined_call_operand.vmem [shape: f32[1,128], index: 1, kind: output, shape index: {}]
  $region1: #{tile.14} parent=0
    #allocation0 [shape = 'u8[4096]{0}', space=vmem, size = 0x1000, scoped, tag = 'scoped mem for output reshape']
    #allocation1 [shape = 'u8[4096]{0}', space=vmem, size = 0x1000, scoped, tag = 'scoped mem for input reshape']
    %s3 = sshllo.u32 0, 4
    %v4 = vld [vmem:[%s0] sm:%s3]
    %5 = vst [vmem:[#allocation1] sm:%s3] %v4
    %v6 = vld [vmem:[#allocation1] sm:$0x1]
    %vm7 = vcmask 261120
    %8 = vst.msk [vmem:[#allocation0] sm:$0x1] %vm7, %v6
    %s9 = scalar_lea.vmem [#allocation1], 3
    %v10 = vld [vmem:[%s9] sm:$0x1]
    %11 = vrot.lane.b32.xlu0 %v10, 96
    %v12 = vpop.permute.xlu0 %11
    %vm13 = vcmask 1048320
    %14 = vst.msk [vmem:[#allocation0] sm:$0x1] %vm13, %v12
    %s15 = scalar_lea.vmem [#allocation1], 2
    %v16 = vld [vmem:[%s15] sm:$0x1]
    %17 = vrot.lane.b32.xlu0 %v16, 64
    %v18 = vpop.permute.xlu0 %17
    %vm19 = vcmask 785920
    %20 = vst.msk [vmem:[#allocation0] sm:$0x1] %vm19, %v18
    %s21 = scalar_lea.vmem [#allocation1], 1
    %v22 = vld [vmem:[%s21] sm:$0x1]
    %23 = vrot.lane.b32.xlu0 %v22, 32
    %v24 = vpop.permute.xlu0 %23
    %vm25 = vcmask 523520
    %26 = vst.msk [vmem:[#allocation0] sm:$0x1] %vm25, %v24
    %s28 = sshllo.u32 0, 1
    %v30 = vld [vmem:[#allocation0] sm:%s28]
    %s31 = sshllo.u32 0, 1
    %32 = vst [vmem:[%s1] sm:%s31] %v30

// kernel: with_bias_layer_norm.1
$region0: #{with_bias_layer_norm.1}
  #allocation0 [shape = 'u32[]', space=smem, size = 0x4, offset = 0x4, fixed_abs, tag = 'smem constant byte address 0x4 - core index']
  #allocation1 [shape = 'u32[144,128]{1,0:T(1,128)}', space=vmem, size = 0x12000, scoped, tag = 'internal scratch']
  %s0 = inlined_call_operand.vmem [shape: f32[128,128], index: 0, kind: input, shape index: {}]
  %s1 = inlined_call_operand.vmem [shape: f32[128,128], index: 1, kind: input, shape index: {}]
  %s2 = inlined_call_operand.vmem [shape: f32[1,128], index: 2, kind: input, shape index: {}]
  %s3 = inlined_call_operand.vmem [shape: f32[1,128], index: 3, kind: input, shape index: {}]
  %s4 = inlined_call_operand.vmem [shape: f32[128,128], index: 4, kind: output, shape index: {}]
  %s5 = sld [smem:[#allocation0]]
  $region26: #{with_bias_layer_norm.1} parent=0
    _
  %s7 = ssub.s32 1, %s5
  %s8 = scalar_select 0, %s7, %s5
  // Predicated region
  $region2: #{with_bias_layer_norm.1} parent=0 // pred_check
    _
  $region3: #{with_bias_layer_norm.1} parent=0 // pred_check_branch
    %10 = sbr.rel (0) target = $region5
  $region4: #{with_bias_layer_norm.1} parent=0 // pred_region
    _
  $region5: #{with_bias_layer_norm.1} parent=0 // pred_fallthru
    _
  // Predicated region
  $region6: #{with_bias_layer_norm.1} parent=0 // pred_check
    _
  $region7: #{with_bias_layer_norm.1} parent=0 // pred_check_branch
    %12 = sbr.rel (0) target = $region9
  $region8: #{with_bias_layer_norm.1} parent=0 // pred_region
    _
  $region9: #{with_bias_layer_norm.1} parent=0 // pred_fallthru
    _
  // Predicated region
  $region10: #{with_bias_layer_norm.1} parent=0 // pred_check
    _
  $region11: #{with_bias_layer_norm.1} parent=0 // pred_check_branch
    %14 = sbr.rel (0) target = $region13
  $region12: #{with_bias_layer_norm.1} parent=0 // pred_region
    _
  $region13: #{with_bias_layer_norm.1} parent=0 // pred_fallthru
    _
  // Predicated region
  $region14: #{with_bias_layer_norm.1} parent=0 // pred_check
    _
  $region15: #{with_bias_layer_norm.1} parent=0 // pred_check_branch
    %16 = sbr.rel (0) target = $region17
  $region16: #{with_bias_layer_norm.1} parent=0 // pred_region
    _
  $region17: #{with_bias_layer_norm.1} parent=0 // pred_fallthru
    _
  %v17 = vld [vmem:[%s0] sm:$0xff]
  %v18 = vld [vmem:[%s0 + $0x8] sm:$0xff]
  %v19 = vld [vmem:[%s0 + $0x10] sm:$0xff]
  %v20 = vld [vmem:[%s0 + $0x18] sm:$0xff]
  %v21 = vld [vmem:[%s0 + $0x20] sm:$0xff]
  %v22 = vld [vmem:[%s0 + $0x28] sm:$0xff]
  %v23 = vld [vmem:[%s0 + $0x30] sm:$0xff]
  %v24 = vld [vmem:[%s0 + $0x38] sm:$0xff]
  %v25 = vld [vmem:[%s0 + $0x40] sm:$0xff]
  %v26 = vld [vmem:[%s0 + $0x48] sm:$0xff]
  %v27 = vld [vmem:[%s0 + $0x50] sm:$0xff]
  %v28 = vld [vmem:[%s0 + $0x58] sm:$0xff]
  %v29 = vld [vmem:[%s0 + $0x60] sm:$0xff]
  %v30 = vld [vmem:[%s0 + $0x68] sm:$0xff]
  %v31 = vld [vmem:[%s0 + $0x70] sm:$0xff]
  %v32 = vld [vmem:[%s0 + $0x78] sm:$0xff]
  %v33 = vld [vmem:[%s1] sm:$0xff]
  %v34 = vld [vmem:[%s1 + $0x8] sm:$0xff]
  %v35 = vld [vmem:[%s1 + $0x10] sm:$0xff]
  %v36 = vld [vmem:[%s1 + $0x18] sm:$0xff]
  %v37 = vld [vmem:[%s1 + $0x20] sm:$0xff]
  %v38 = vld [vmem:[%s1 + $0x28] sm:$0xff]
  %v39 = vld [vmem:[%s1 + $0x30] sm:$0xff]
  %v40 = vld [vmem:[%s1 + $0x38] sm:$0xff]
  %v41 = vld [vmem:[%s1 + $0x40] sm:$0xff]
  %v42 = vld [vmem:[%s1 + $0x48] sm:$0xff]
  %v43 = vld [vmem:[%s1 + $0x50] sm:$0xff]
  %v44 = vld [vmem:[%s1 + $0x58] sm:$0xff]
  %v45 = vld [vmem:[%s1 + $0x60] sm:$0xff]
  %v46 = vld [vmem:[%s1 + $0x68] sm:$0xff]
  %v47 = vld [vmem:[%s1 + $0x70] sm:$0xff]
  %v48 = vld [vmem:[%s1 + $0x78] sm:$0xff]
  %49 = vmatprep.subr.mxu0 0.0
  %v50 = vand.u32 %v33, 4294901760
  %51 = vmatpush1.msra.mxu0 %v50
  %52 = vmatprep.subr.mxu0 0.0
  %v53 = vand.u32 %v34, 4294901760
  %54 = vmatpush1.msra.mxu0 %v53
  %55 = vmatprep.subr.mxu0 0.0
  %v56 = vand.u32 %v35, 4294901760
  %57 = vmatpush1.msra.mxu0 %v56
  %58 = vmatprep.subr.mxu0 0.0
  %v59 = vand.u32 %v36, 4294901760
  %60 = vmatpush1.msra.mxu0 %v59
  %61 = vmatprep.subr.mxu0 0.0
  %v62 = vand.u32 %v37, 4294901760
  %63 = vmatpush1.msra.mxu0 %v62
  %64 = vmatprep.subr.mxu0 0.0
  %v65 = vand.u32 %v38, 4294901760
  %66 = vmatpush1.msra.mxu0 %v65
  %67 = vmatprep.subr.mxu0 0.0
  %v68 = vand.u32 %v39, 4294901760
  %69 = vmatpush1.msra.mxu0 %v68
  %70 = vmatprep.subr.mxu0 0.0
  %v71 = vand.u32 %v40, 4294901760
  %72 = vmatpush1.msra.mxu0 %v71
  %73 = vmatprep.subr.mxu0 0.0
  %v74 = vand.u32 %v41, 4294901760
  %75 = vmatpush1.msra.mxu0 %v74
  %76 = vmatprep.subr.mxu0 0.0
  %v77 = vand.u32 %v42, 4294901760
  %78 = vmatpush1.msra.mxu0 %v77
  %79 = vmatprep.subr.mxu0 0.0
  %v80 = vand.u32 %v43, 4294901760
  %81 = vmatpush1.msra.mxu0 %v80
  %82 = vmatprep.subr.mxu0 0.0
  %v83 = vand.u32 %v44, 4294901760
  %84 = vmatpush1.msra.mxu0 %v83
  %85 = vmatprep.subr.mxu0 0.0
  %v86 = vand.u32 %v45, 4294901760
  %87 = vmatpush1.msra.mxu0 %v86
  %88 = vmatprep.subr.mxu0 0.0
  %v89 = vand.u32 %v46, 4294901760
  %90 = vmatpush1.msra.mxu0 %v89
  %91 = vmatprep.subr.mxu0 0.0
  %v92 = vand.u32 %v47, 4294901760
  %93 = vmatpush1.msra.mxu0 %v92
  %94 = vmatprep.subr.mxu0 0.0
  %v95 = vand.u32 %v48, 4294901760
  %96 = vmatpush1.msra.mxu0 %v95
  %97 = vmatprep.subr.mxu0 0.0
  %98 = vmatpush1.msra.mxu0 0.0
  %99 = vmatprep.subr.mxu0 0.0
  %100 = vmatpush1.msra.mxu0 0.0
  %101 = vmatprep.subr.mxu0 0.0
  %102 = vmatpush1.msra.mxu0 0.0
  %103 = vmatprep.subr.mxu0 0.0
  %104 = vmatpush1.msra.mxu0 0.0
  %105 = vmatprep.subr.mxu0 0.0
  %106 = vmatpush1.msra.mxu0 0.0
  %107 = vmatprep.subr.mxu0 0.0
  %108 = vmatpush1.msra.mxu0 0.0
  %109 = vmatprep.subr.mxu0 0.0
  %110 = vmatpush1.msra.mxu0 0.0
  %111 = vmatprep.subr.mxu0 0.0
  %112 = vmatpush1.msra.mxu0 0.0
  %113 = vmatprep.subr.mxu0 0.0
  %114 = vmatpush1.msra.mxu0 0.0
  %115 = vmatprep.subr.mxu0 0.0
  %116 = vmatpush1.msra.mxu0 0.0
  %117 = vmatprep.subr.mxu0 0.0
  %118 = vmatpush1.msra.mxu0 0.0
  %119 = vmatprep.subr.mxu0 0.0
  %120 = vmatpush1.msra.mxu0 0.0
  %121 = vmatprep.subr.mxu0 0.0
  %122 = vmatpush1.msra.mxu0 0.0
  %123 = vmatprep.subr.mxu0 0.0
  %124 = vmatpush1.msra.mxu0 0.0
  %125 = vmatprep.subr.mxu0 0.0
  %126 = vmatpush1.msra.mxu0 0.0
  %127 = vmatprep.subr.mxu0 0.0
  %128 = vmatpush1.msra.mxu0 0.0
  %129 = vmatprep.mubr.f32.mxu0 0.0
  %v130 = vand.u32 %v17, 4294901760
  %v131 = vsub.f32 %v17, %v130
  %v132 = vand.u32 %v131, 4294901760
  %v133 = vsub.f32 %v131, %v132
  %v134 = vand.u32 %v133, 4294901760
  %135 = vmatmul.mubr.f32.gmra.mrb[0].mxu0 %v134
  %v136 = vpop.f32.mrb[0].mxu0
  %v137 = vadd.f32 0.0, %v136
  %v138 = vpop.f32.mrb[0].mxu0
  %139 = vmatprep.mubr.f32.mxu0 0.0
  %v140 = vand.u32 %v18, 4294901760
  %v141 = vsub.f32 %v18, %v140
  %v142 = vand.u32 %v141, 4294901760
  %v143 = vsub.f32 %v141, %v142
  %v144 = vand.u32 %v143, 4294901760
  %145 = vmatmul.mubr.f32.gmra.mrb[0].mxu0 %v144
  %v146 = vpop.f32.mrb[0].mxu0
  %v147 = vadd.f32 0.0, %v146
  %v148 = vpop.f32.mrb[0].mxu0
  %149 = vmatprep.mubr.f32.mxu0 0.0
  %v150 = vand.u32 %v19, 4294901760
  %v151 = vsub.f32 %v19, %v150
  %v152 = vand.u32 %v151, 4294901760
  %v153 = vsub.f32 %v151, %v152
  %v154 = vand.u32 %v153, 4294901760
  %155 = vmatmul.mubr.f32.gmra.mrb[0].mxu0 %v154
  %v156 = vpop.f32.mrb[0].mxu0
  %v157 = vadd.f32 0.0, %v156
  %v158 = vpop.f32.mrb[0].mxu0
  %159 = vmatprep.mubr.f32.mxu0 0.0
  %v160 = vand.u32 %v20, 4294901760
  %v161 = vsub.f32 %v20, %v160
  %v162 = vand.u32 %v161, 4294901760
  %v163 = vsub.f32 %v161, %v162
  %v164 = vand.u32 %v163, 4294901760
  %165 = vmatmul.mubr.f32.gmra.mrb[0].mxu0 %v164
  %v166 = vpop.f32.mrb[0].mxu0
  %v167 = vadd.f32 0.0, %v166
  %v168 = vpop.f32.mrb[0].mxu0
  %169 = vmatprep.mubr.f32.mxu0 0.0
  %v170 = vand.u32 %v21, 4294901760
  %v171 = vsub.f32 %v21, %v170
  %v172 = vand.u32 %v171, 4294901760
  %v173 = vsub.f32 %v171, %v172
  %v174 = vand.u32 %v173, 4294901760
  %175 = vmatmul.mubr.f32.gmra.mrb[0].mxu0 %v174
  %v176 = vpop.f32.mrb[0].mxu0
  %v177 = vadd.f32 0.0, %v176
  %v178 = vpop.f32.mrb[0].mxu0
  %179 = vmatprep.mubr.f32.mxu0 0.0
  %v180 = vand.u32 %v22, 4294901760
  %v181 = vsub.f32 %v22, %v180
  %v182 = vand.u32 %v181, 4294901760
  %v183 = vsub.f32 %v181, %v182
  %v184 = vand.u32 %v183, 4294901760
  %185 = vmatmul.mubr.f32.gmra.mrb[0].mxu0 %v184
  %v186 = vpop.f32.mrb[0].mxu0
  %v187 = vadd.f32 0.0, %v186
  %v188 = vpop.f32.mrb[0].mxu0
  %189 = vmatprep.mubr.f32.mxu0 0.0
  %v190 = vand.u32 %v23, 4294901760
  %v191 = vsub.f32 %v23, %v190
  %v192 = vand.u32 %v191, 4294901760
  %v193 = vsub.f32 %v191, %v192
  %v194 = vand.u32 %v193, 4294901760
  %195 = vmatmul.mubr.f32.gmra.mrb[0].mxu0 %v194
  %v196 = vpop.f32.mrb[0].mxu0
  %v197 = vadd.f32 0.0, %v196
  %v198 = vpop.f32.mrb[0].mxu0
  %199 = vmatprep.mubr.f32.mxu0 0.0
  %v200 = vand.u32 %v24, 4294901760
  %v201 = vsub.f32 %v24, %v200
  %v202 = vand.u32 %v201, 4294901760
  %v203 = vsub.f32 %v201, %v202
  %v204 = vand.u32 %v203, 4294901760
  %205 = vmatmul.mubr.f32.gmra.mrb[0].mxu0 %v204
  %v206 = vpop.f32.mrb[0].mxu0
  %v207 = vadd.f32 0.0, %v206
  %v208 = vpop.f32.mrb[0].mxu0
  %209 = vmatprep.mubr.f32.mxu0 0.0
  %v210 = vand.u32 %v25, 4294901760
  %v211 = vsub.f32 %v25, %v210
  %v212 = vand.u32 %v211, 4294901760
  %v213 = vsub.f32 %v211, %v212
  %v214 = vand.u32 %v213, 4294901760
  %215 = vmatmul.mubr.f32.gmra.mrb[0].mxu0 %v214
  %v216 = vpop.f32.mrb[0].mxu0
  %v217 = vadd.f32 0.0, %v216
  %v218 = vpop.f32.mrb[0].mxu0
  %219 = vmatprep.mubr.f32.mxu0 0.0
  %v220 = vand.u32 %v26, 4294901760
  %v221 = vsub.f32 %v26, %v220
  %v222 = vand.u32 %v221, 4294901760
  %v223 = vsub.f32 %v221, %v222
  %v224 = vand.u32 %v223, 4294901760
  %225 = vmatmul.mubr.f32.gmra.mrb[0].mxu0 %v224
  %v226 = vpop.f32.mrb[0].mxu0
  %v227 = vadd.f32 0.0, %v226
  %v228 = vpop.f32.mrb[0].mxu0
  %229 = vmatprep.mubr.f32.mxu0 0.0
  %v230 = vand.u32 %v27, 4294901760
  %v231 = vsub.f32 %v27, %v230
  %v232 = vand.u32 %v231, 4294901760
  %v233 = vsub.f32 %v231, %v232
  %v234 = vand.u32 %v233, 4294901760
  %235 = vmatmul.mubr.f32.gmra.mrb[0].mxu0 %v234
  %v236 = vpop.f32.mrb[0].mxu0
  %v237 = vadd.f32 0.0, %v236
  %v238 = vpop.f32.mrb[0].mxu0
  %239 = vmatprep.mubr.f32.mxu0 0.0
  %v240 = vand.u32 %v28, 4294901760
  %v241 = vsub.f32 %v28, %v240
  %v242 = vand.u32 %v241, 4294901760
  %v243 = vsub.f32 %v241, %v242
  %v244 = vand.u32 %v243, 4294901760
  %245 = vmatmul.mubr.f32.gmra.mrb[0].mxu0 %v244
  %v246 = vpop.f32.mrb[0].mxu0
  %v247 = vadd.f32 0.0, %v246
  %v248 = vpop.f32.mrb[0].mxu0
  %249 = vmatprep.mubr.f32.mxu0 0.0
  %v250 = vand.u32 %v29, 4294901760
  %v251 = vsub.f32 %v29, %v250
  %v252 = vand.u32 %v251, 4294901760
  %v253 = vsub.f32 %v251, %v252
  %v254 = vand.u32 %v253, 4294901760
  %255 = vmatmul.mubr.f32.gmra.mrb[0].mxu0 %v254
  %v256 = vpop.f32.mrb[0].mxu0
  %v257 = vadd.f32 0.0, %v256
  %v258 = vpop.f32.mrb[0].mxu0
  %259 = vmatprep.mubr.f32.mxu0 0.0
  %v260 = vand.u32 %v30, 4294901760
  %v261 = vsub.f32 %v30, %v260
  %v262 = vand.u32 %v261, 4294901760
  %v263 = vsub.f32 %v261, %v262
  %v264 = vand.u32 %v263, 4294901760
  %265 = vmatmul.mubr.f32.gmra.mrb[0].mxu0 %v264
  %v266 = vpop.f32.mrb[0].mxu0
  %v267 = vadd.f32 0.0, %v266
  %v268 = vpop.f32.mrb[0].mxu0
  %269 = vmatprep.mubr.f32.mxu0 0.0
  %v270 = vand.u32 %v31, 4294901760
  %v271 = vsub.f32 %v31, %v270
  %v272 = vand.u32 %v271, 4294901760
  %v273 = vsub.f32 %v271, %v272
  %v274 = vand.u32 %v273, 4294901760
  %275 = vmatmul.mubr.f32.gmra.mrb[0].mxu0 %v274
  %v276 = vpop.f32.mrb[0].mxu0
  %v277 = vadd.f32 0.0, %v276
  %v278 = vpop.f32.mrb[0].mxu0
  %279 = vmatprep.mubr.f32.mxu0 0.0
  %v280 = vand.u32 %v32, 4294901760
  %v281 = vsub.f32 %v32, %v280
  %v282 = vand.u32 %v281, 4294901760
  %v283 = vsub.f32 %v281, %v282
  %v284 = vand.u32 %v283, 4294901760
  %285 = vmatmul.mubr.f32.gmra.mrb[0].mxu0 %v284
  %v286 = vpop.f32.mrb[0].mxu0
  %v287 = vadd.f32 0.0, %v286
  %v288 = vpop.f32.mrb[0].mxu0
  %289 = vdwg.mxu0
  %290 = vmatprep.subr.mxu0 0.0
  %v291 = vand.u32 %v33, 4294901760
  %v292 = vsub.f32 %v33, %v291
  %v293 = vand.u32 %v292, 4294901760
  %v294 = vsub.f32 %v292, %v293
  %v295 = vand.u32 %v294, 4294901760
  %296 = vmatpush1.msra.mxu0 %v295
  %297 = vmatprep.subr.mxu0 0.0
  %v298 = vand.u32 %v34, 4294901760
  %v299 = vsub.f32 %v34, %v298
  %v300 = vand.u32 %v299, 4294901760
  %v301 = vsub.f32 %v299, %v300
  %v302 = vand.u32 %v301, 4294901760
  %303 = vmatpush1.msra.mxu0 %v302
  %304 = vmatprep.subr.mxu0 0.0
  %v305 = vand.u32 %v35, 4294901760
  %v306 = vsub.f32 %v35, %v305
  %v307 = vand.u32 %v306, 4294901760
  %v308 = vsub.f32 %v306, %v307
  %v309 = vand.u32 %v308, 4294901760
  %310 = vmatpush1.msra.mxu0 %v309
  %311 = vmatprep.subr.mxu0 0.0
  %v312 = vand.u32 %v36, 4294901760
  %v313 = vsub.f32 %v36, %v312
  %v314 = vand.u32 %v313, 4294901760
  %v315 = vsub.f32 %v313, %v314
  %v316 = vand.u32 %v315, 4294901760
  %317 = vmatpush1.msra.mxu0 %v316
  %318 = vmatprep.subr.mxu0 0.0
  %v319 = vand.u32 %v37, 4294901760
  %v320 = vsub.f32 %v37, %v319
  %v321 = vand.u32 %v320, 4294901760
  %v322 = vsub.f32 %v320, %v321
  %v323 = vand.u32 %v322, 4294901760
  %324 = vmatpush1.msra.mxu0 %v323
  %325 = vmatprep.subr.mxu0 0.0
  %v326 = vand.u32 %v38, 4294901760
  %v327 = vsub.f32 %v38, %v326
  %v328 = vand.u32 %v327, 4294901760
  %v329 = vsub.f32 %v327, %v328
  %v330 = vand.u32 %v329, 4294901760
  %331 = vmatpush1.msra.mxu0 %v330
  %332 = vmatprep.subr.mxu0 0.0
  %v333 = vand.u32 %v39, 4294901760
  %v334 = vsub.f32 %v39, %v333
  %v335 = vand.u32 %v334, 4294901760
  %v336 = vsub.f32 %v334, %v335
  %v337 = vand.u32 %v336, 4294901760
  %338 = vmatpush1.msra.mxu0 %v337
  %339 = vmatprep.subr.mxu0 0.0
  %v340 = vand.u32 %v40, 4294901760
  %v341 = vsub.f32 %v40, %v340
  %v342 = vand.u32 %v341, 4294901760
  %v343 = vsub.f32 %v341, %v342
  %v344 = vand.u32 %v343, 4294901760
  %345 = vmatpush1.msra.mxu0 %v344
  %346 = vmatprep.subr.mxu0 0.0
  %v347 = vand.u32 %v41, 4294901760
  %v348 = vsub.f32 %v41, %v347
  %v349 = vand.u32 %v348, 4294901760
  %v350 = vsub.f32 %v348, %v349
  %v351 = vand.u32 %v350, 4294901760
  %352 = vmatpush1.msra.mxu0 %v351
  %353 = vmatprep.subr.mxu0 0.0
  %v354 = vand.u32 %v42, 4294901760
  %v355 = vsub.f32 %v42, %v354
  %v356 = vand.u32 %v355, 4294901760
  %v357 = vsub.f32 %v355, %v356
  %v358 = vand.u32 %v357, 4294901760
  %359 = vmatpush1.msra.mxu0 %v358
  %360 = vmatprep.subr.mxu0 0.0
  %v361 = vand.u32 %v43, 4294901760
  %v362 = vsub.f32 %v43, %v361
  %v363 = vand.u32 %v362, 4294901760
  %v364 = vsub.f32 %v362, %v363
  %v365 = vand.u32 %v364, 4294901760
  %366 = vmatpush1.msra.mxu0 %v365
  %367 = vmatprep.subr.mxu0 0.0
  %v368 = vand.u32 %v44, 4294901760
  %v369 = vsub.f32 %v44, %v368
  %v370 = vand.u32 %v369, 4294901760
  %v371 = vsub.f32 %v369, %v370
  %v372 = vand.u32 %v371, 4294901760
  %373 = vmatpush1.msra.mxu0 %v372
  %374 = vmatprep.subr.mxu0 0.0
  %v375 = vand.u32 %v45, 4294901760
  %v376 = vsub.f32 %v45, %v375
  %v377 = vand.u32 %v376, 4294901760
  %v378 = vsub.f32 %v376, %v377
  %v379 = vand.u32 %v378, 4294901760
  %380 = vmatpush1.msra.mxu0 %v379
  %381 = vmatprep.subr.mxu0 0.0
  %v382 = vand.u32 %v46, 4294901760
  %v383 = vsub.f32 %v46, %v382
  %v384 = vand.u32 %v383, 4294901760
  %v385 = vsub.f32 %v383, %v384
  %v386 = vand.u32 %v385, 4294901760
  %387 = vmatpush1.msra.mxu0 %v386
  %388 = vmatprep.subr.mxu0 0.0
  %v389 = vand.u32 %v47, 4294901760
  %v390 = vsub.f32 %v47, %v389
  %v391 = vand.u32 %v390, 4294901760
  %v392 = vsub.f32 %v390, %v391
  %v393 = vand.u32 %v392, 4294901760
  %394 = vmatpush1.msra.mxu0 %v393
  %395 = vmatprep.subr.mxu0 0.0
  %v396 = vand.u32 %v48, 4294901760
  %v397 = vsub.f32 %v48, %v396
  %v398 = vand.u32 %v397, 4294901760
  %v399 = vsub.f32 %v397, %v398
  %v400 = vand.u32 %v399, 4294901760
  %401 = vmatpush1.msra.mxu0 %v400
  %402 = vmatprep.subr.mxu0 0.0
  %403 = vmatpush1.msra.mxu0 0.0
  %404 = vmatprep.subr.mxu0 0.0
  %405 = vmatpush1.msra.mxu0 0.0
  %406 = vmatprep.subr.mxu0 0.0
  %407 = vmatpush1.msra.mxu0 0.0
  %408 = vmatprep.subr.mxu0 0.0
  %409 = vmatpush1.msra.mxu0 0.0
  %410 = vmatprep.subr.mxu0 0.0
  %411 = vmatpush1.msra.mxu0 0.0
  %412 = vmatprep.subr.mxu0 0.0
  %413 = vmatpush1.msra.mxu0 0.0
  %414 = vmatprep.subr.mxu0 0.0
  %415 = vmatpush1.msra.mxu0 0.0
  %416 = vmatprep.subr.mxu0 0.0
  %417 = vmatpush1.msra.mxu0 0.0
  %418 = vmatprep.subr.mxu0 0.0
  %419 = vmatpush1.msra.mxu0 0.0
  %420 = vmatprep.subr.mxu0 0.0
  %421 = vmatpush1.msra.mxu0 0.0
  %422 = vmatprep.subr.mxu0 0.0
  %423 = vmatpush1.msra.mxu0 0.0
  %424 = vmatprep.subr.mxu0 0.0
  %425 = vmatpush1.msra.mxu0 0.0
  %426 = vmatprep.subr.mxu0 0.0
  %427 = vmatpush1.msra.mxu0 0.0
  %428 = vmatprep.subr.mxu0 0.0
  %429 = vmatpush1.msra.mxu0 0.0
  %430 = vmatprep.subr.mxu0 0.0
  %431 = vmatpush1.msra.mxu0 0.0
  %432 = vmatprep.subr.mxu0 0.0
  %433 = vmatpush1.msra.mxu0 0.0
  %434 = vmatprep.mubr.f32.mxu0 0.0
  %v435 = vand.u32 %v17, 4294901760
  %436 = vmatmul.mubr.f32.gmra.mrb[0].mxu0 %v435
  %v437 = vpop.f32.mrb[0].mxu0
  %v438 = vadd.f32 %v137, %v437
  %v439 = vpop.f32.mrb[0].mxu0
  %440 = vmatprep.mubr.f32.mxu0 0.0
  %v441 = vand.u32 %v18, 4294901760
  %442 = vmatmul.mubr.f32.gmra.mrb[0].mxu0 %v441
  %v443 = vpop.f32.mrb[0].mxu0
  %v444 = vadd.f32 %v147, %v443
  %v445 = vpop.f32.mrb[0].mxu0
  %446 = vmatprep.mubr.f32.mxu0 0.0
  %v447 = vand.u32 %v19, 4294901760
  %448 = vmatmul.mubr.f32.gmra.mrb[0].mxu0 %v447
  %v449 = vpop.f32.mrb[0].mxu0
  %v450 = vadd.f32 %v157, %v449
  %v451 = vpop.f32.mrb[0].mxu0
  %452 = vmatprep.mubr.f32.mxu0 0.0
  %v453 = vand.u32 %v20, 4294901760
  %454 = vmatmul.mubr.f32.gmra.mrb[0].mxu0 %v453
  %v455 = vpop.f32.mrb[0].mxu0
  %v456 = vadd.f32 %v167, %v455
  %v457 = vpop.f32.mrb[0].mxu0
  %458 = vmatprep.mubr.f32.mxu0 0.0
  %v459 = vand.u32 %v21, 4294901760
  %460 = vmatmul.mubr.f32.gmra.mrb[0].mxu0 %v459
  %v461 = vpop.f32.mrb[0].mxu0
  %v462 = vadd.f32 %v177, %v461
  %v463 = vpop.f32.mrb[0].mxu0
  %464 = vmatprep.mubr.f32.mxu0 0.0
  %v465 = vand.u32 %v22, 4294901760
  %466 = vmatmul.mubr.f32.gmra.mrb[0].mxu0 %v465
  %v467 = vpop.f32.mrb[0].mxu0
  %v468 = vadd.f32 %v187, %v467
  %v469 = vpop.f32.mrb[0].mxu0
  %470 = vmatprep.mubr.f32.mxu0 0.0
  %v471 = vand.u32 %v23, 4294901760
  %472 = vmatmul.mubr.f32.gmra.mrb[0].mxu0 %v471
  %v473 = vpop.f32.mrb[0].mxu0
  %v474 = vadd.f32 %v197, %v473
  %v475 = vpop.f32.mrb[0].mxu0
  %476 = vmatprep.mubr.f32.mxu0 0.0
  %v477 = vand.u32 %v24, 4294901760
  %478 = vmatmul.mubr.f32.gmra.mrb[0].mxu0 %v477
  %v479 = vpop.f32.mrb[0].mxu0
  %v480 = vadd.f32 %v207, %v479
  %v481 = vpop.f32.mrb[0].mxu0
  %482 = vmatprep.mubr.f32.mxu0 0.0
  %v483 = vand.u32 %v25, 4294901760
  %484 = vmatmul.mubr.f32.gmra.mrb[0].mxu0 %v483
  %v485 = vpop.f32.mrb[0].mxu0
  %v486 = vadd.f32 %v217, %v485
  %v487 = vpop.f32.mrb[0].mxu0
  %488 = vmatprep.mubr.f32.mxu0 0.0
  %v489 = vand.u32 %v26, 4294901760
  %490 = vmatmul.mubr.f32.gmra.mrb[0].mxu0 %v489
  %v491 = vpop.f32.mrb[0].mxu0
  %v492 = vadd.f32 %v227, %v491
  %v493 = vpop.f32.mrb[0].mxu0
  %494 = vmatprep.mubr.f32.mxu0 0.0
  %v495 = vand.u32 %v27, 4294901760
  %496 = vmatmul.mubr.f32.gmra.mrb[0].mxu0 %v495
  %v497 = vpop.f32.mrb[0].mxu0
  %v498 = vadd.f32 %v237, %v497
  %v499 = vpop.f32.mrb[0].mxu0
  %500 = vmatprep.mubr.f32.mxu0 0.0
  %v501 = vand.u32 %v28, 4294901760
  %502 = vmatmul.mubr.f32.gmra.mrb[0].mxu0 %v501
  %v503 = vpop.f32.mrb[0].mxu0
  %v504 = vadd.f32 %v247, %v503
  %v505 = vpop.f32.mrb[0].mxu0
  %506 = vmatprep.mubr.f32.mxu0 0.0
  %v507 = vand.u32 %v29, 4294901760
  %508 = vmatmul.mubr.f32.gmra.mrb[0].mxu0 %v507
  %v509 = vpop.f32.mrb[0].mxu0
  %v510 = vadd.f32 %v257, %v509
  %v511 = vpop.f32.mrb[0].mxu0
  %512 = vmatprep.mubr.f32.mxu0 0.0
  %v513 = vand.u32 %v30, 4294901760
  %514 = vmatmul.mubr.f32.gmra.mrb[0].mxu0 %v513
  %v515 = vpop.f32.mrb[0].mxu0
  %v516 = vadd.f32 %v267, %v515
  %v517 = vpop.f32.mrb[0].mxu0
  %518 = vmatprep.mubr.f32.mxu0 0.0
  %v519 = vand.u32 %v31, 4294901760
  %520 = vmatmul.mubr.f32.gmra.mrb[0].mxu0 %v519
  %v521 = vpop.f32.mrb[0].mxu0
  %v522 = vadd.f32 %v277, %v521
  %v523 = vpop.f32.mrb[0].mxu0
  %524 = vmatprep.mubr.f32.mxu0 0.0
  %v525 = vand.u32 %v32, 4294901760
  %526 = vmatmul.mubr.f32.gmra.mrb[0].mxu0 %v525
  %v527 = vpop.f32.mrb[0].mxu0
  %v528 = vadd.f32 %v287, %v527
  %v529 = vpop.f32.mrb[0].mxu0
  %530 = vdwg.mxu0
  %531 = vmatprep.subr.mxu0 0.0
  %v532 = vand.u32 %v33, 4294901760
  %v533 = vsub.f32 %v33, %v532
  %534 = vmatpush1.msra.mxu0 %v533
  %535 = vmatprep.subr.mxu0 0.0
  %v536 = vand.u32 %v34, 4294901760
  %v537 = vsub.f32 %v34, %v536
  %538 = vmatpush1.msra.mxu0 %v537
  %539 = vmatprep.subr.mxu0 0.0
  %v540 = vand.u32 %v35, 4294901760
  %v541 = vsub.f32 %v35, %v540
  %542 = vmatpush1.msra.mxu0 %v541
  %543 = vmatprep.subr.mxu0 0.0
  %v544 = vand.u32 %v36, 4294901760
  %v545 = vsub.f32 %v36, %v544
  %546 = vmatpush1.msra.mxu0 %v545
  %547 = vmatprep.subr.mxu0 0.0
  %v548 = vand.u32 %v37, 4294901760
  %v549 = vsub.f32 %v37, %v548
  %550 = vmatpush1.msra.mxu0 %v549
  %551 = vmatprep.subr.mxu0 0.0
  %v552 = vand.u32 %v38, 4294901760
  %v553 = vsub.f32 %v38, %v552
  %554 = vmatpush1.msra.mxu0 %v553
  %555 = vmatprep.subr.mxu0 0.0
  %v556 = vand.u32 %v39, 4294901760
  %v557 = vsub.f32 %v39, %v556
  %558 = vmatpush1.msra.mxu0 %v557
  %559 = vmatprep.subr.mxu0 0.0
  %v560 = vand.u32 %v40, 4294901760
  %v561 = vsub.f32 %v40, %v560
  %562 = vmatpush1.msra.mxu0 %v561
  %563 = vmatprep.subr.mxu0 0.0
  %v564 = vand.u32 %v41, 4294901760
  %v565 = vsub.f32 %v41, %v564
  %566 = vmatpush1.msra.mxu0 %v565
  %567 = vmatprep.subr.mxu0 0.0
  %v568 = vand.u32 %v42, 4294901760
  %v569 = vsub.f32 %v42, %v568
  %570 = vmatpush1.msra.mxu0 %v569
  %571 = vmatprep.subr.mxu0 0.0
  %v572 = vand.u32 %v43, 4294901760
  %v573 = vsub.f32 %v43, %v572
  %574 = vmatpush1.msra.mxu0 %v573
  %575 = vmatprep.subr.mxu0 0.0
  %v576 = vand.u32 %v44, 4294901760
  %v577 = vsub.f32 %v44, %v576
  %578 = vmatpush1.msra.mxu0 %v577
  %579 = vmatprep.subr.mxu0 0.0
  %v580 = vand.u32 %v45, 4294901760
  %v581 = vsub.f32 %v45, %v580
  %582 = vmatpush1.msra.mxu0 %v581
  %583 = vmatprep.subr.mxu0 0.0
  %v584 = vand.u32 %v46, 4294901760
  %v585 = vsub.f32 %v46, %v584
  %586 = vmatpush1.msra.mxu0 %v585
  %587 = vmatprep.subr.mxu0 0.0
  %v588 = vand.u32 %v47, 4294901760
  %v589 = vsub.f32 %v47, %v588
  %590 = vmatpush1.msra.mxu0 %v589
  %591 = vmatprep.subr.mxu0 0.0
  %v592 = vand.u32 %v48, 4294901760
  %v593 = vsub.f32 %v48, %v592
  %594 = vmatpush1.msra.mxu0 %v593
  %595 = vmatprep.subr.mxu0 0.0
  %596 = vmatpush1.msra.mxu0 0.0
  %597 = vmatprep.subr.mxu0 0.0
  %598 = vmatpush1.msra.mxu0 0.0
  %599 = vmatprep.subr.mxu0 0.0
  %600 = vmatpush1.msra.mxu0 0.0
  %601 = vmatprep.subr.mxu0 0.0
  %602 = vmatpush1.msra.mxu0 0.0
  %603 = vmatprep.subr.mxu0 0.0
  %604 = vmatpush1.msra.mxu0 0.0
  %605 = vmatprep.subr.mxu0 0.0
  %606 = vmatpush1.msra.mxu0 0.0
  %607 = vmatprep.subr.mxu0 0.0
  %608 = vmatpush1.msra.mxu0 0.0
  %609 = vmatprep.subr.mxu0 0.0
  %610 = vmatpush1.msra.mxu0 0.0
  %611 = vmatprep.subr.mxu0 0.0
  %612 = vmatpush1.msra.mxu0 0.0
  %613 = vmatprep.subr.mxu0 0.0
  %614 = vmatpush1.msra.mxu0 0.0
  %615 = vmatprep.subr.mxu0 0.0
  %616 = vmatpush1.msra.mxu0 0.0
  %617 = vmatprep.subr.mxu0 0.0
  %618 = vmatpush1.msra.mxu0 0.0
  %619 = vmatprep.subr.mxu0 0.0
  %620 = vmatpush1.msra.mxu0 0.0
  %621 = vmatprep.subr.mxu0 0.0
  %622 = vmatpush1.msra.mxu0 0.0
  %623 = vmatprep.subr.mxu0 0.0
  %624 = vmatpush1.msra.mxu0 0.0
  %625 = vmatprep.subr.mxu0 0.0
  %626 = vmatpush1.msra.mxu0 0.0
  %627 = vmatprep.mubr.f32.mxu0 0.0
  %v628 = vand.u32 %v17, 4294901760
  %v629 = vsub.f32 %v17, %v628
  %630 = vmatmul.mubr.f32.gmra.mrb[0].mxu0 %v629
  %v631 = vpop.f32.mrb[0].mxu0
  %v632 = vadd.f32 %v438, %v631
  %v633 = vpop.f32.mrb[0].mxu0
  %634 = vmatprep.mubr.f32.mxu0 0.0
  %v635 = vand.u32 %v18, 4294901760
  %v636 = vsub.f32 %v18, %v635
  %637 = vmatmul.mubr.f32.gmra.mrb[0].mxu0 %v636
  %v638 = vpop.f32.mrb[0].mxu0
  %v639 = vadd.f32 %v444, %v638
  %v640 = vpop.f32.mrb[0].mxu0
  %641 = vmatprep.mubr.f32.mxu0 0.0
  %v642 = vand.u32 %v19, 4294901760
  %v643 = vsub.f32 %v19, %v642
  %644 = vmatmul.mubr.f32.gmra.mrb[0].mxu0 %v643
  %v645 = vpop.f32.mrb[0].mxu0
  %v646 = vadd.f32 %v450, %v645
  %v647 = vpop.f32.mrb[0].mxu0
  %648 = vmatprep.mubr.f32.mxu0 0.0
  %v649 = vand.u32 %v20, 4294901760
  %v650 = vsub.f32 %v20, %v649
  %651 = vmatmul.mubr.f32.gmra.mrb[0].mxu0 %v650
  %v652 = vpop.f32.mrb[0].mxu0
  %v653 = vadd.f32 %v456, %v652
  %v654 = vpop.f32.mrb[0].mxu0
  %655 = vmatprep.mubr.f32.mxu0 0.0
  %v656 = vand.u32 %v21, 4294901760
  %v657 = vsub.f32 %v21, %v656
  %658 = vmatmul.mubr.f32.gmra.mrb[0].mxu0 %v657
  %v659 = vpop.f32.mrb[0].mxu0
  %v660 = vadd.f32 %v462, %v659
  %v661 = vpop.f32.mrb[0].mxu0
  %662 = vmatprep.mubr.f32.mxu0 0.0
  %v663 = vand.u32 %v22, 4294901760
  %v664 = vsub.f32 %v22, %v663
  %665 = vmatmul.mubr.f32.gmra.mrb[0].mxu0 %v664
  %v666 = vpop.f32.mrb[0].mxu0
  %v667 = vadd.f32 %v468, %v666
  %v668 = vpop.f32.mrb[0].mxu0
  %669 = vmatprep.mubr.f32.mxu0 0.0
  %v670 = vand.u32 %v23, 4294901760
  %v671 = vsub.f32 %v23, %v670
  %672 = vmatmul.mubr.f32.gmra.mrb[0].mxu0 %v671
  %v673 = vpop.f32.mrb[0].mxu0
  %v674 = vadd.f32 %v474, %v673
  %v675 = vpop.f32.mrb[0].mxu0
  %676 = vmatprep.mubr.f32.mxu0 0.0
  %v677 = vand.u32 %v24, 4294901760
  %v678 = vsub.f32 %v24, %v677
  %679 = vmatmul.mubr.f32.gmra.mrb[0].mxu0 %v678
  %v680 = vpop.f32.mrb[0].mxu0
  %v681 = vadd.f32 %v480, %v680
  %v682 = vpop.f32.mrb[0].mxu0
  %683 = vmatprep.mubr.f32.mxu0 0.0
  %v684 = vand.u32 %v25, 4294901760
  %v685 = vsub.f32 %v25, %v684
  %686 = vmatmul.mubr.f32.gmra.mrb[0].mxu0 %v685
  %v687 = vpop.f32.mrb[0].mxu0
  %v688 = vadd.f32 %v486, %v687
  %v689 = vpop.f32.mrb[0].mxu0
  %690 = vmatprep.mubr.f32.mxu0 0.0
  %v691 = vand.u32 %v26, 4294901760
  %v692 = vsub.f32 %v26, %v691
  %693 = vmatmul.mubr.f32.gmra.mrb[0].mxu0 %v692
  %v694 = vpop.f32.mrb[0].mxu0
  %v695 = vadd.f32 %v492, %v694
  %v696 = vpop.f32.mrb[0].mxu0
  %697 = vmatprep.mubr.f32.mxu0 0.0
  %v698 = vand.u32 %v27, 4294901760
  %v699 = vsub.f32 %v27, %v698
  %700 = vmatmul.mubr.f32.gmra.mrb[0].mxu0 %v699
  %v701 = vpop.f32.mrb[0].mxu0
  %v702 = vadd.f32 %v498, %v701
  %v703 = vpop.f32.mrb[0].mxu0
  %704 = vmatprep.mubr.f32.mxu0 0.0
  %v705 = vand.u32 %v28, 4294901760
  %v706 = vsub.f32 %v28, %v705
  %707 = vmatmul.mubr.f32.gmra.mrb[0].mxu0 %v706
  %v708 = vpop.f32.mrb[0].mxu0
  %v709 = vadd.f32 %v504, %v708
  %v710 = vpop.f32.mrb[0].mxu0
  %711 = vmatprep.mubr.f32.mxu0 0.0
  %v712 = vand.u32 %v29, 4294901760
  %v713 = vsub.f32 %v29, %v712
  %714 = vmatmul.mubr.f32.gmra.mrb[0].mxu0 %v713
  %v715 = vpop.f32.mrb[0].mxu0
  %v716 = vadd.f32 %v510, %v715
  %v717 = vpop.f32.mrb[0].mxu0
  %718 = vmatprep.mubr.f32.mxu0 0.0
  %v719 = vand.u32 %v30, 4294901760
  %v720 = vsub.f32 %v30, %v719
  %721 = vmatmul.mubr.f32.gmra.mrb[0].mxu0 %v720
  %v722 = vpop.f32.mrb[0].mxu0
  %v723 = vadd.f32 %v516, %v722
  %v724 = vpop.f32.mrb[0].mxu0
  %725 = vmatprep.mubr.f32.mxu0 0.0
  %v726 = vand.u32 %v31, 4294901760
  %v727 = vsub.f32 %v31, %v726
  %728 = vmatmul.mubr.f32.gmra.mrb[0].mxu0 %v727
  %v729 = vpop.f32.mrb[0].mxu0
  %v730 = vadd.f32 %v522, %v729
  %v731 = vpop.f32.mrb[0].mxu0
  %732 = vmatprep.mubr.f32.mxu0 0.0
  %v733 = vand.u32 %v32, 4294901760
  %v734 = vsub.f32 %v32, %v733
  %735 = vmatmul.mubr.f32.gmra.mrb[0].mxu0 %v734
  %v736 = vpop.f32.mrb[0].mxu0
  %v737 = vadd.f32 %v528, %v736
  %v738 = vpop.f32.mrb[0].mxu0
  %739 = vdwg.mxu0
  %740 = vmatprep.subr.mxu0 0.0
  %v741 = vand.u32 %v33, 4294901760
  %742 = vmatpush1.msra.mxu0 %v741
  %743 = vmatprep.subr.mxu0 0.0
  %v744 = vand.u32 %v34, 4294901760
  %745 = vmatpush1.msra.mxu0 %v744
  %746 = vmatprep.subr.mxu0 0.0
  %v747 = vand.u32 %v35, 4294901760
  %748 = vmatpush1.msra.mxu0 %v747
  %749 = vmatprep.subr.mxu0 0.0
  %v750 = vand.u32 %v36, 4294901760
  %751 = vmatpush1.msra.mxu0 %v750
  %752 = vmatprep.subr.mxu0 0.0
  %v753 = vand.u32 %v37, 4294901760
  %754 = vmatpush1.msra.mxu0 %v753
  %755 = vmatprep.subr.mxu0 0.0
  %v756 = vand.u32 %v38, 4294901760
  %757 = vmatpush1.msra.mxu0 %v756
  %758 = vmatprep.subr.mxu0 0.0
  %v759 = vand.u32 %v39, 4294901760
  %760 = vmatpush1.msra.mxu0 %v759
  %761 = vmatprep.subr.mxu0 0.0
  %v762 = vand.u32 %v40, 4294901760
  %763 = vmatpush1.msra.mxu0 %v762
  %764 = vmatprep.subr.mxu0 0.0
  %v765 = vand.u32 %v41, 4294901760
  %766 = vmatpush1.msra.mxu0 %v765
  %767 = vmatprep.subr.mxu0 0.0
  %v768 = vand.u32 %v42, 4294901760
  %769 = vmatpush1.msra.mxu0 %v768
  %770 = vmatprep.subr.mxu0 0.0
  %v771 = vand.u32 %v43, 4294901760
  %772 = vmatpush1.msra.mxu0 %v771
  %773 = vmatprep.subr.mxu0 0.0
  %v774 = vand.u32 %v44, 4294901760
  %775 = vmatpush1.msra.mxu0 %v774
  %776 = vmatprep.subr.mxu0 0.0
  %v777 = vand.u32 %v45, 4294901760
  %778 = vmatpush1.msra.mxu0 %v777
  %779 = vmatprep.subr.mxu0 0.0
  %v780 = vand.u32 %v46, 4294901760
  %781 = vmatpush1.msra.mxu0 %v780
  %782 = vmatprep.subr.mxu0 0.0
  %v783 = vand.u32 %v47, 4294901760
  %784 = vmatpush1.msra.mxu0 %v783
  %785 = vmatprep.subr.mxu0 0.0
  %v786 = vand.u32 %v48, 4294901760
  %787 = vmatpush1.msra.mxu0 %v786
  %788 = vmatprep.subr.mxu0 0.0
  %789 = vmatpush1.msra.mxu0 0.0
  %790 = vmatprep.subr.mxu0 0.0
  %791 = vmatpush1.msra.mxu0 0.0
  %792 = vmatprep.subr.mxu0 0.0
  %793 = vmatpush1.msra.mxu0 0.0
  %794 = vmatprep.subr.mxu0 0.0
  %795 = vmatpush1.msra.mxu0 0.0
  %796 = vmatprep.subr.mxu0 0.0
  %797 = vmatpush1.msra.mxu0 0.0
  %798 = vmatprep.subr.mxu0 0.0
  %799 = vmatpush1.msra.mxu0 0.0
  %800 = vmatprep.subr.mxu0 0.0
  %801 = vmatpush1.msra.mxu0 0.0
  %802 = vmatprep.subr.mxu0 0.0
  %803 = vmatpush1.msra.mxu0 0.0
  %804 = vmatprep.subr.mxu0 0.0
  %805 = vmatpush1.msra.mxu0 0.0
  %806 = vmatprep.subr.mxu0 0.0
  %807 = vmatpush1.msra.mxu0 0.0
  %808 = vmatprep.subr.mxu0 0.0
  %809 = vmatpush1.msra.mxu0 0.0
  %810 = vmatprep.subr.mxu0 0.0
  %811 = vmatpush1.msra.mxu0 0.0
  %812 = vmatprep.subr.mxu0 0.0
  %813 = vmatpush1.msra.mxu0 0.0
  %814 = vmatprep.subr.mxu0 0.0
  %815 = vmatpush1.msra.mxu0 0.0
  %816 = vmatprep.subr.mxu0 0.0
  %817 = vmatpush1.msra.mxu0 0.0
  %818 = vmatprep.subr.mxu0 0.0
  %819 = vmatpush1.msra.mxu0 0.0
  %820 = vmatprep.mubr.f32.mxu0 0.0
  %v821 = vand.u32 %v17, 4294901760
  %v822 = vsub.f32 %v17, %v821
  %v823 = vand.u32 %v822, 4294901760
  %824 = vmatmul.mubr.f32.gmra.mrb[0].mxu0 %v823
  %v825 = vpop.f32.mrb[0].mxu0
  %v826 = vadd.f32 %v632, %v825
  %v827 = vpop.f32.mrb[0].mxu0
  %828 = vmatprep.mubr.f32.mxu0 0.0
  %v829 = vand.u32 %v18, 4294901760
  %v830 = vsub.f32 %v18, %v829
  %v831 = vand.u32 %v830, 4294901760
  %832 = vmatmul.mubr.f32.gmra.mrb[0].mxu0 %v831
  %v833 = vpop.f32.mrb[0].mxu0
  %v834 = vadd.f32 %v639, %v833
  %v835 = vpop.f32.mrb[0].mxu0
  %836 = vmatprep.mubr.f32.mxu0 0.0
  %v837 = vand.u32 %v19, 4294901760
  %v838 = vsub.f32 %v19, %v837
  %v839 = vand.u32 %v838, 4294901760
  %840 = vmatmul.mubr.f32.gmra.mrb[0].mxu0 %v839
  %v841 = vpop.f32.mrb[0].mxu0
  %v842 = vadd.f32 %v646, %v841
  %v843 = vpop.f32.mrb[0].mxu0
  %844 = vmatprep.mubr.f32.mxu0 0.0
  %v845 = vand.u32 %v20, 4294901760
  %v846 = vsub.f32 %v20, %v845
  %v847 = vand.u32 %v846, 4294901760
  %848 = vmatmul.mubr.f32.gmra.mrb[0].mxu0 %v847
  %v849 = vpop.f32.mrb[0].mxu0
  %v850 = vadd.f32 %v653, %v849
  %v851 = vpop.f32.mrb[0].mxu0
  %852 = vmatprep.mubr.f32.mxu0 0.0
  %v853 = vand.u32 %v21, 4294901760
  %v854 = vsub.f32 %v21, %v853
  %v855 = vand.u32 %v854, 4294901760
  %856 = vmatmul.mubr.f32.gmra.mrb[0].mxu0 %v855
  %v857 = vpop.f32.mrb[0].mxu0
  %v858 = vadd.f32 %v660, %v857
  %v859 = vpop.f32.mrb[0].mxu0
  %860 = vmatprep.mubr.f32.mxu0 0.0
  %v861 = vand.u32 %v22, 4294901760
  %v862 = vsub.f32 %v22, %v861
  %v863 = vand.u32 %v862, 4294901760
  %864 = vmatmul.mubr.f32.gmra.mrb[0].mxu0 %v863
  %v865 = vpop.f32.mrb[0].mxu0
  %v866 = vadd.f32 %v667, %v865
  %v867 = vpop.f32.mrb[0].mxu0
  %868 = vmatprep.mubr.f32.mxu0 0.0
  %v869 = vand.u32 %v23, 4294901760
  %v870 = vsub.f32 %v23, %v869
  %v871 = vand.u32 %v870, 4294901760
  %872 = vmatmul.mubr.f32.gmra.mrb[0].mxu0 %v871
  %v873 = vpop.f32.mrb[0].mxu0
  %v874 = vadd.f32 %v674, %v873
  %v875 = vpop.f32.mrb[0].mxu0
  %876 = vmatprep.mubr.f32.mxu0 0.0
  %v877 = vand.u32 %v24, 4294901760
  %v878 = vsub.f32 %v24, %v877
  %v879 = vand.u32 %v878, 4294901760
  %880 = vmatmul.mubr.f32.gmra.mrb[0].mxu0 %v879
  %v881 = vpop.f32.mrb[0].mxu0
  %v882 = vadd.f32 %v681, %v881
  %v883 = vpop.f32.mrb[0].mxu0
  %884 = vmatprep.mubr.f32.mxu0 0.0
  %v885 = vand.u32 %v25, 4294901760
  %v886 = vsub.f32 %v25, %v885
  %v887 = vand.u32 %v886, 4294901760
  %888 = vmatmul.mubr.f32.gmra.mrb[0].mxu0 %v887
  %v889 = vpop.f32.mrb[0].mxu0
  %v890 = vadd.f32 %v688, %v889
  %v891 = vpop.f32.mrb[0].mxu0
  %892 = vmatprep.mubr.f32.mxu0 0.0
  %v893 = vand.u32 %v26, 4294901760
  %v894 = vsub.f32 %v26, %v893
  %v895 = vand.u32 %v894, 4294901760
  %896 = vmatmul.mubr.f32.gmra.mrb[0].mxu0 %v895
  %v897 = vpop.f32.mrb[0].mxu0
  %v898 = vadd.f32 %v695, %v897
  %v899 = vpop.f32.mrb[0].mxu0
  %900 = vmatprep.mubr.f32.mxu0 0.0
  %v901 = vand.u32 %v27, 4294901760
  %v902 = vsub.f32 %v27, %v901
  %v903 = vand.u32 %v902, 4294901760
  %904 = vmatmul.mubr.f32.gmra.mrb[0].mxu0 %v903
  %v905 = vpop.f32.mrb[0].mxu0
  %v906 = vadd.f32 %v702, %v905
  %v907 = vpop.f32.mrb[0].mxu0
  %908 = vmatprep.mubr.f32.mxu0 0.0
  %v909 = vand.u32 %v28, 4294901760
  %v910 = vsub.f32 %v28, %v909
  %v911 = vand.u32 %v910, 4294901760
  %912 = vmatmul.mubr.f32.gmra.mrb[0].mxu0 %v911
  %v913 = vpop.f32.mrb[0].mxu0
  %v914 = vadd.f32 %v709, %v913
  %v915 = vpop.f32.mrb[0].mxu0
  %916 = vmatprep.mubr.f32.mxu0 0.0
  %v917 = vand.u32 %v29, 4294901760
  %v918 = vsub.f32 %v29, %v917
  %v919 = vand.u32 %v918, 4294901760
  %920 = vmatmul.mubr.f32.gmra.mrb[0].mxu0 %v919
  %v921 = vpop.f32.mrb[0].mxu0
  %v922 = vadd.f32 %v716, %v921
  %v923 = vpop.f32.mrb[0].mxu0
  %924 = vmatprep.mubr.f32.mxu0 0.0
  %v925 = vand.u32 %v30, 4294901760
  %v926 = vsub.f32 %v30, %v925
  %v927 = vand.u32 %v926, 4294901760
  %928 = vmatmul.mubr.f32.gmra.mrb[0].mxu0 %v927
  %v929 = vpop.f32.mrb[0].mxu0
  %v930 = vadd.f32 %v723, %v929
  %v931 = vpop.f32.mrb[0].mxu0
  %932 = vmatprep.mubr.f32.mxu0 0.0
  %v933 = vand.u32 %v31, 4294901760
  %v934 = vsub.f32 %v31, %v933
  %v935 = vand.u32 %v934, 4294901760
  %936 = vmatmul.mubr.f32.gmra.mrb[0].mxu0 %v935
  %v937 = vpop.f32.mrb[0].mxu0
  %v938 = vadd.f32 %v730, %v937
  %v939 = vpop.f32.mrb[0].mxu0
  %940 = vmatprep.mubr.f32.mxu0 0.0
  %v941 = vand.u32 %v32, 4294901760
  %v942 = vsub.f32 %v32, %v941
  %v943 = vand.u32 %v942, 4294901760
  %944 = vmatmul.mubr.f32.gmra.mrb[0].mxu0 %v943
  %v945 = vpop.f32.mrb[0].mxu0
  %v946 = vadd.f32 %v737, %v945
  %v947 = vpop.f32.mrb[0].mxu0
  %948 = vdwg.mxu0
  %949 = vmatprep.subr.mxu0 0.0
  %v950 = vand.u32 %v33, 4294901760
  %v951 = vsub.f32 %v33, %v950
  %v952 = vand.u32 %v951, 4294901760
  %953 = vmatpush1.msra.mxu0 %v952
  %954 = vmatprep.subr.mxu0 0.0
  %v955 = vand.u32 %v34, 4294901760
  %v956 = vsub.f32 %v34, %v955
  %v957 = vand.u32 %v956, 4294901760
  %958 = vmatpush1.msra.mxu0 %v957
  %959 = vmatprep.subr.mxu0 0.0
  %v960 = vand.u32 %v35, 4294901760
  %v961 = vsub.f32 %v35, %v960
  %v962 = vand.u32 %v961, 4294901760
  %963 = vmatpush1.msra.mxu0 %v962
  %964 = vmatprep.subr.mxu0 0.0
  %v965 = vand.u32 %v36, 4294901760
  %v966 = vsub.f32 %v36, %v965
  %v967 = vand.u32 %v966, 4294901760
  %968 = vmatpush1.msra.mxu0 %v967
  %969 = vmatprep.subr.mxu0 0.0
  %v970 = vand.u32 %v37, 4294901760
  %v971 = vsub.f32 %v37, %v970
  %v972 = vand.u32 %v971, 4294901760
  %973 = vmatpush1.msra.mxu0 %v972
  %974 = vmatprep.subr.mxu0 0.0
  %v975 = vand.u32 %v38, 4294901760
  %v976 = vsub.f32 %v38, %v975
  %v977 = vand.u32 %v976, 4294901760
  %978 = vmatpush1.msra.mxu0 %v977
  %979 = vmatprep.subr.mxu0 0.0
  %v980 = vand.u32 %v39, 4294901760
  %v981 = vsub.f32 %v39, %v980
  %v982 = vand.u32 %v981, 4294901760
  %983 = vmatpush1.msra.mxu0 %v982
  %984 = vmatprep.subr.mxu0 0.0
  %v985 = vand.u32 %v40, 4294901760
  %v986 = vsub.f32 %v40, %v985
  %v987 = vand.u32 %v986, 4294901760
  %988 = vmatpush1.msra.mxu0 %v987
  %989 = vmatprep.subr.mxu0 0.0
  %v990 = vand.u32 %v41, 4294901760
  %v991 = vsub.f32 %v41, %v990
  %v992 = vand.u32 %v991, 4294901760
  %993 = vmatpush1.msra.mxu0 %v992
  %994 = vmatprep.subr.mxu0 0.0
  %v995 = vand.u32 %v42, 4294901760
  %v996 = vsub.f32 %v42, %v995
  %v997 = vand.u32 %v996, 4294901760
  %998 = vmatpush1.msra.mxu0 %v997
  %999 = vmatprep.subr.mxu0 0.0
  %v1000 = vand.u32 %v43, 4294901760
  %v1001 = vsub.f32 %v43, %v1000
  %v1002 = vand.u32 %v1001, 4294901760
  %1003 = vmatpush1.msra.mxu0 %v1002
  %1004 = vmatprep.subr.mxu0 0.0
  %v1005 = vand.u32 %v44, 4294901760
  %v1006 = vsub.f32 %v44, %v1005
  %v1007 = vand.u32 %v1006, 4294901760
  %1008 = vmatpush1.msra.mxu0 %v1007
  %1009 = vmatprep.subr.mxu0 0.0
  %v1010 = vand.u32 %v45, 4294901760
  %v1011 = vsub.f32 %v45, %v1010
  %v1012 = vand.u32 %v1011, 4294901760
  %1013 = vmatpush1.msra.mxu0 %v1012
  %1014 = vmatprep.subr.mxu0 0.0
  %v1015 = vand.u32 %v46, 4294901760
  %v1016 = vsub.f32 %v46, %v1015
  %v1017 = vand.u32 %v1016, 4294901760
  %1018 = vmatpush1.msra.mxu0 %v1017
  %1019 = vmatprep.subr.mxu0 0.0
  %v1020 = vand.u32 %v47, 4294901760
  %v1021 = vsub.f32 %v47, %v1020
  %v1022 = vand.u32 %v1021, 4294901760
  %1023 = vmatpush1.msra.mxu0 %v1022
  %1024 = vmatprep.subr.mxu0 0.0
  %v1025 = vand.u32 %v48, 4294901760
  %v1026 = vsub.f32 %v48, %v1025
  %v1027 = vand.u32 %v1026, 4294901760
  %1028 = vmatpush1.msra.mxu0 %v1027
  %1029 = vmatprep.subr.mxu0 0.0
  %1030 = vmatpush1.msra.mxu0 0.0
  %1031 = vmatprep.subr.mxu0 0.0
  %1032 = vmatpush1.msra.mxu0 0.0
  %1033 = vmatprep.subr.mxu0 0.0
  %1034 = vmatpush1.msra.mxu0 0.0
  %1035 = vmatprep.subr.mxu0 0.0
  %1036 = vmatpush1.msra.mxu0 0.0
  %1037 = vmatprep.subr.mxu0 0.0
  %1038 = vmatpush1.msra.mxu0 0.0
  %1039 = vmatprep.subr.mxu0 0.0
  %1040 = vmatpush1.msra.mxu0 0.0
  %1041 = vmatprep.subr.mxu0 0.0
  %1042 = vmatpush1.msra.mxu0 0.0
  %1043 = vmatprep.subr.mxu0 0.0
  %1044 = vmatpush1.msra.mxu0 0.0
  %1045 = vmatprep.subr.mxu0 0.0
  %1046 = vmatpush1.msra.mxu0 0.0
  %1047 = vmatprep.subr.mxu0 0.0
  %1048 = vmatpush1.msra.mxu0 0.0
  %1049 = vmatprep.subr.mxu0 0.0
  %1050 = vmatpush1.msra.mxu0 0.0
  %1051 = vmatprep.subr.mxu0 0.0
  %1052 = vmatpush1.msra.mxu0 0.0
  %1053 = vmatprep.subr.mxu0 0.0
  %1054 = vmatpush1.msra.mxu0 0.0
  %1055 = vmatprep.subr.mxu0 0.0
  %1056 = vmatpush1.msra.mxu0 0.0
  %1057 = vmatprep.subr.mxu0 0.0
  %1058 = vmatpush1.msra.mxu0 0.0
  %1059 = vmatprep.subr.mxu0 0.0
  %1060 = vmatpush1.msra.mxu0 0.0
  %1061 = vmatprep.mubr.f32.mxu0 0.0
  %v1062 = vand.u32 %v17, 4294901760
  %1063 = vmatmul.mubr.f32.gmra.mrb[0].mxu0 %v1062
  %v1064 = vpop.f32.mrb[0].mxu0
  %v1065 = vadd.f32 %v826, %v1064
  %v1066 = vpop.f32.mrb[0].mxu0
  %1067 = vmatprep.mubr.f32.mxu0 0.0
  %v1068 = vand.u32 %v18, 4294901760
  %1069 = vmatmul.mubr.f32.gmra.mrb[0].mxu0 %v1068
  %v1070 = vpop.f32.mrb[0].mxu0
  %v1071 = vadd.f32 %v834, %v1070
  %v1072 = vpop.f32.mrb[0].mxu0
  %1073 = vmatprep.mubr.f32.mxu0 0.0
  %v1074 = vand.u32 %v19, 4294901760
  %1075 = vmatmul.mubr.f32.gmra.mrb[0].mxu0 %v1074
  %v1076 = vpop.f32.mrb[0].mxu0
  %v1077 = vadd.f32 %v842, %v1076
  %v1078 = vpop.f32.mrb[0].mxu0
  %1079 = vmatprep.mubr.f32.mxu0 0.0
  %v1080 = vand.u32 %v20, 4294901760
  %1081 = vmatmul.mubr.f32.gmra.mrb[0].mxu0 %v1080
  %v1082 = vpop.f32.mrb[0].mxu0
  %v1083 = vadd.f32 %v850, %v1082
  %v1084 = vpop.f32.mrb[0].mxu0
  %1085 = vmatprep.mubr.f32.mxu0 0.0
  %v1086 = vand.u32 %v21, 4294901760
  %1087 = vmatmul.mubr.f32.gmra.mrb[0].mxu0 %v1086
  %v1088 = vpop.f32.mrb[0].mxu0
  %v1089 = vadd.f32 %v858, %v1088
  %v1090 = vpop.f32.mrb[0].mxu0
  %1091 = vmatprep.mubr.f32.mxu0 0.0
  %v1092 = vand.u32 %v22, 4294901760
  %1093 = vmatmul.mubr.f32.gmra.mrb[0].mxu0 %v1092
  %v1094 = vpop.f32.mrb[0].mxu0
  %v1095 = vadd.f32 %v866, %v1094
  %v1096 = vpop.f32.mrb[0].mxu0
  %1097 = vmatprep.mubr.f32.mxu0 0.0
  %v1098 = vand.u32 %v23, 4294901760
  %1099 = vmatmul.mubr.f32.gmra.mrb[0].mxu0 %v1098
  %v1100 = vpop.f32.mrb[0].mxu0
  %v1101 = vadd.f32 %v874, %v1100
  %v1102 = vpop.f32.mrb[0].mxu0
  %1103 = vmatprep.mubr.f32.mxu0 0.0
  %v1104 = vand.u32 %v24, 4294901760
  %1105 = vmatmul.mubr.f32.gmra.mrb[0].mxu0 %v1104
  %v1106 = vpop.f32.mrb[0].mxu0
  %v1107 = vadd.f32 %v882, %v1106
  %v1108 = vpop.f32.mrb[0].mxu0
  %1109 = vmatprep.mubr.f32.mxu0 0.0
  %v1110 = vand.u32 %v25, 4294901760
  %1111 = vmatmul.mubr.f32.gmra.mrb[0].mxu0 %v1110
  %v1112 = vpop.f32.mrb[0].mxu0
  %v1113 = vadd.f32 %v890, %v1112
  %v1114 = vpop.f32.mrb[0].mxu0
  %1115 = vmatprep.mubr.f32.mxu0 0.0
  %v1116 = vand.u32 %v26, 4294901760
  %1117 = vmatmul.mubr.f32.gmra.mrb[0].mxu0 %v1116
  %v1118 = vpop.f32.mrb[0].mxu0
  %v1119 = vadd.f32 %v898, %v1118
  %v1120 = vpop.f32.mrb[0].mxu0
  %1121 = vmatprep.mubr.f32.mxu0 0.0
  %v1122 = vand.u32 %v27, 4294901760
  %1123 = vmatmul.mubr.f32.gmra.mrb[0].mxu0 %v1122
  %v1124 = vpop.f32.mrb[0].mxu0
  %v1125 = vadd.f32 %v906, %v1124
  %v1126 = vpop.f32.mrb[0].mxu0
  %1127 = vmatprep.mubr.f32.mxu0 0.0
  %v1128 = vand.u32 %v28, 4294901760
  %1129 = vmatmul.mubr.f32.gmra.mrb[0].mxu0 %v1128
  %v1130 = vpop.f32.mrb[0].mxu0
  %v1131 = vadd.f32 %v914, %v1130
  %v1132 = vpop.f32.mrb[0].mxu0
  %1133 = vmatprep.mubr.f32.mxu0 0.0
  %v1134 = vand.u32 %v29, 4294901760
  %1135 = vmatmul.mubr.f32.gmra.mrb[0].mxu0 %v1134
  %v1136 = vpop.f32.mrb[0].mxu0
  %v1137 = vadd.f32 %v922, %v1136
  %v1138 = vpop.f32.mrb[0].mxu0
  %1139 = vmatprep.mubr.f32.mxu0 0.0
  %v1140 = vand.u32 %v30, 4294901760
  %1141 = vmatmul.mubr.f32.gmra.mrb[0].mxu0 %v1140
  %v1142 = vpop.f32.mrb[0].mxu0
  %v1143 = vadd.f32 %v930, %v1142
  %v1144 = vpop.f32.mrb[0].mxu0
  %1145 = vmatprep.mubr.f32.mxu0 0.0
  %v1146 = vand.u32 %v31, 4294901760
  %1147 = vmatmul.mubr.f32.gmra.mrb[0].mxu0 %v1146
  %v1148 = vpop.f32.mrb[0].mxu0
  %v1149 = vadd.f32 %v938, %v1148
  %v1150 = vpop.f32.mrb[0].mxu0
  %1151 = vmatprep.mubr.f32.mxu0 0.0
  %v1152 = vand.u32 %v32, 4294901760
  %1153 = vmatmul.mubr.f32.gmra.mrb[0].mxu0 %v1152
  %v1154 = vpop.f32.mrb[0].mxu0
  %v1155 = vadd.f32 %v946, %v1154
  %v1156 = vpop.f32.mrb[0].mxu0
  %1157 = vdwg.mxu0
  %1158 = vmatprep.subr.mxu0 0.0
  %v1159 = vand.u32 %v33, 4294901760
  %1160 = vmatpush1.msra.mxu0 %v1159
  %1161 = vmatprep.subr.mxu0 0.0
  %v1162 = vand.u32 %v34, 4294901760
  %1163 = vmatpush1.msra.mxu0 %v1162
  %1164 = vmatprep.subr.mxu0 0.0
  %v1165 = vand.u32 %v35, 4294901760
  %1166 = vmatpush1.msra.mxu0 %v1165
  %1167 = vmatprep.subr.mxu0 0.0
  %v1168 = vand.u32 %v36, 4294901760
  %1169 = vmatpush1.msra.mxu0 %v1168
  %1170 = vmatprep.subr.mxu0 0.0
  %v1171 = vand.u32 %v37, 4294901760
  %1172 = vmatpush1.msra.mxu0 %v1171
  %1173 = vmatprep.subr.mxu0 0.0
  %v1174 = vand.u32 %v38, 4294901760
  %1175 = vmatpush1.msra.mxu0 %v1174
  %1176 = vmatprep.subr.mxu0 0.0
  %v1177 = vand.u32 %v39, 4294901760
  %1178 = vmatpush1.msra.mxu0 %v1177
  %1179 = vmatprep.subr.mxu0 0.0
  %v1180 = vand.u32 %v40, 4294901760
  %1181 = vmatpush1.msra.mxu0 %v1180
  %1182 = vmatprep.subr.mxu0 0.0
  %v1183 = vand.u32 %v41, 4294901760
  %1184 = vmatpush1.msra.mxu0 %v1183
  %1185 = vmatprep.subr.mxu0 0.0
  %v1186 = vand.u32 %v42, 4294901760
  %1187 = vmatpush1.msra.mxu0 %v1186
  %1188 = vmatprep.subr.mxu0 0.0
  %v1189 = vand.u32 %v43, 4294901760
  %1190 = vmatpush1.msra.mxu0 %v1189
  %1191 = vmatprep.subr.mxu0 0.0
  %v1192 = vand.u32 %v44, 4294901760
  %1193 = vmatpush1.msra.mxu0 %v1192
  %1194 = vmatprep.subr.mxu0 0.0
  %v1195 = vand.u32 %v45, 4294901760
  %1196 = vmatpush1.msra.mxu0 %v1195
  %1197 = vmatprep.subr.mxu0 0.0
  %v1198 = vand.u32 %v46, 4294901760
  %1199 = vmatpush1.msra.mxu0 %v1198
  %1200 = vmatprep.subr.mxu0 0.0
  %v1201 = vand.u32 %v47, 4294901760
  %1202 = vmatpush1.msra.mxu0 %v1201
  %1203 = vmatprep.subr.mxu0 0.0
  %v1204 = vand.u32 %v48, 4294901760
  %1205 = vmatpush1.msra.mxu0 %v1204
  %1206 = vmatprep.subr.mxu0 0.0
  %1207 = vmatpush1.msra.mxu0 0.0
  %1208 = vmatprep.subr.mxu0 0.0
  %1209 = vmatpush1.msra.mxu0 0.0
  %1210 = vmatprep.subr.mxu0 0.0
  %1211 = vmatpush1.msra.mxu0 0.0
  %1212 = vmatprep.subr.mxu0 0.0
  %1213 = vmatpush1.msra.mxu0 0.0
  %1214 = vmatprep.subr.mxu0 0.0
  %1215 = vmatpush1.msra.mxu0 0.0
  %1216 = vmatprep.subr.mxu0 0.0
  %1217 = vmatpush1.msra.mxu0 0.0
  %1218 = vmatprep.subr.mxu0 0.0
  %1219 = vmatpush1.msra.mxu0 0.0
  %1220 = vmatprep.subr.mxu0 0.0
  %1221 = vmatpush1.msra.mxu0 0.0
  %1222 = vmatprep.subr.mxu0 0.0
  %1223 = vmatpush1.msra.mxu0 0.0
  %1224 = vmatprep.subr.mxu0 0.0
  %1225 = vmatpush1.msra.mxu0 0.0
  %1226 = vmatprep.subr.mxu0 0.0
  %1227 = vmatpush1.msra.mxu0 0.0
  %1228 = vmatprep.subr.mxu0 0.0
  %1229 = vmatpush1.msra.mxu0 0.0
  %1230 = vmatprep.subr.mxu0 0.0
  %1231 = vmatpush1.msra.mxu0 0.0
  %1232 = vmatprep.subr.mxu0 0.0
  %1233 = vmatpush1.msra.mxu0 0.0
  %1234 = vmatprep.subr.mxu0 0.0
  %1235 = vmatpush1.msra.mxu0 0.0
  %1236 = vmatprep.subr.mxu0 0.0
  %1237 = vmatpush1.msra.mxu0 0.0
  %1238 = vmatprep.mubr.f32.mxu0 0.0
  %v1239 = vand.u32 %v17, 4294901760
  %1240 = vmatmul.mubr.f32.gmra.mrb[0].mxu0 %v1239
  %v1241 = vpop.f32.mrb[0].mxu0
  %v1242 = vadd.f32 %v1065, %v1241
  %v1243 = vpop.f32.mrb[0].mxu0
  %1244 = vmatprep.mubr.f32.mxu0 0.0
  %v1245 = vand.u32 %v18, 4294901760
  %1246 = vmatmul.mubr.f32.gmra.mrb[0].mxu0 %v1245
  %v1247 = vpop.f32.mrb[0].mxu0
  %v1248 = vadd.f32 %v1071, %v1247
  %v1249 = vpop.f32.mrb[0].mxu0
  %1250 = vmatprep.mubr.f32.mxu0 0.0
  %v1251 = vand.u32 %v19, 4294901760
  %1252 = vmatmul.mubr.f32.gmra.mrb[0].mxu0 %v1251
  %v1253 = vpop.f32.mrb[0].mxu0
  %v1254 = vadd.f32 %v1077, %v1253
  %v1255 = vpop.f32.mrb[0].mxu0
  %1256 = vmatprep.mubr.f32.mxu0 0.0
  %v1257 = vand.u32 %v20, 4294901760
  %1258 = vmatmul.mubr.f32.gmra.mrb[0].mxu0 %v1257
  %v1259 = vpop.f32.mrb[0].mxu0
  %v1260 = vadd.f32 %v1083, %v1259
  %v1261 = vpop.f32.mrb[0].mxu0
  %1262 = vmatprep.mubr.f32.mxu0 0.0
  %v1263 = vand.u32 %v21, 4294901760
  %1264 = vmatmul.mubr.f32.gmra.mrb[0].mxu0 %v1263
  %v1265 = vpop.f32.mrb[0].mxu0
  %v1266 = vadd.f32 %v1089, %v1265
  %v1267 = vpop.f32.mrb[0].mxu0
  %1268 = vmatprep.mubr.f32.mxu0 0.0
  %v1269 = vand.u32 %v22, 4294901760
  %1270 = vmatmul.mubr.f32.gmra.mrb[0].mxu0 %v1269
  %v1271 = vpop.f32.mrb[0].mxu0
  %v1272 = vadd.f32 %v1095, %v1271
  %v1273 = vpop.f32.mrb[0].mxu0
  %1274 = vmatprep.mubr.f32.mxu0 0.0
  %v1275 = vand.u32 %v23, 4294901760
  %1276 = vmatmul.mubr.f32.gmra.mrb[0].mxu0 %v1275
  %v1277 = vpop.f32.mrb[0].mxu0
  %v1278 = vadd.f32 %v1101, %v1277
  %v1279 = vpop.f32.mrb[0].mxu0
  %1280 = vmatprep.mubr.f32.mxu0 0.0
  %v1281 = vand.u32 %v24, 4294901760
  %1282 = vmatmul.mubr.f32.gmra.mrb[0].mxu0 %v1281
  %v1283 = vpop.f32.mrb[0].mxu0
  %v1284 = vadd.f32 %v1107, %v1283
  %v1285 = vpop.f32.mrb[0].mxu0
  %1286 = vmatprep.mubr.f32.mxu0 0.0
  %v1287 = vand.u32 %v25, 4294901760
  %1288 = vmatmul.mubr.f32.gmra.mrb[0].mxu0 %v1287
  %v1289 = vpop.f32.mrb[0].mxu0
  %v1290 = vadd.f32 %v1113, %v1289
  %v1291 = vpop.f32.mrb[0].mxu0
  %1292 = vmatprep.mubr.f32.mxu0 0.0
  %v1293 = vand.u32 %v26, 4294901760
  %1294 = vmatmul.mubr.f32.gmra.mrb[0].mxu0 %v1293
  %v1295 = vpop.f32.mrb[0].mxu0
  %v1296 = vadd.f32 %v1119, %v1295
  %v1297 = vpop.f32.mrb[0].mxu0
  %1298 = vmatprep.mubr.f32.mxu0 0.0
  %v1299 = vand.u32 %v27, 4294901760
  %1300 = vmatmul.mubr.f32.gmra.mrb[0].mxu0 %v1299
  %v1301 = vpop.f32.mrb[0].mxu0
  %v1302 = vadd.f32 %v1125, %v1301
  %v1303 = vpop.f32.mrb[0].mxu0
  %1304 = vmatprep.mubr.f32.mxu0 0.0
  %v1305 = vand.u32 %v28, 4294901760
  %1306 = vmatmul.mubr.f32.gmra.mrb[0].mxu0 %v1305
  %v1307 = vpop.f32.mrb[0].mxu0
  %v1308 = vadd.f32 %v1131, %v1307
  %v1309 = vpop.f32.mrb[0].mxu0
  %1310 = vmatprep.mubr.f32.mxu0 0.0
  %v1311 = vand.u32 %v29, 4294901760
  %1312 = vmatmul.mubr.f32.gmra.mrb[0].mxu0 %v1311
  %v1313 = vpop.f32.mrb[0].mxu0
  %v1314 = vadd.f32 %v1137, %v1313
  %v1315 = vpop.f32.mrb[0].mxu0
  %1316 = vmatprep.mubr.f32.mxu0 0.0
  %v1317 = vand.u32 %v30, 4294901760
  %1318 = vmatmul.mubr.f32.gmra.mrb[0].mxu0 %v1317
  %v1319 = vpop.f32.mrb[0].mxu0
  %v1320 = vadd.f32 %v1143, %v1319
  %v1321 = vpop.f32.mrb[0].mxu0
  %1322 = vmatprep.mubr.f32.mxu0 0.0
  %v1323 = vand.u32 %v31, 4294901760
  %1324 = vmatmul.mubr.f32.gmra.mrb[0].mxu0 %v1323
  %v1325 = vpop.f32.mrb[0].mxu0
  %v1326 = vadd.f32 %v1149, %v1325
  %v1327 = vpop.f32.mrb[0].mxu0
  %1328 = vmatprep.mubr.f32.mxu0 0.0
  %v1329 = vand.u32 %v32, 4294901760
  %1330 = vmatmul.mubr.f32.gmra.mrb[0].mxu0 %v1329
  %v1331 = vpop.f32.mrb[0].mxu0
  %v1332 = vadd.f32 %v1155, %v1331
  %v1333 = vpop.f32.mrb[0].mxu0
  %1334 = vdwg.mxu0
  %v1335 = vmul.f32 %v1242, 0.03125
  %v1336 = vmul.f32 %v1248, 0.03125
  %v1337 = vmul.f32 %v1254, 0.03125
  %v1338 = vmul.f32 %v1260, 0.03125
  %v1339 = vmul.f32 %v1266, 0.03125
  %v1340 = vmul.f32 %v1272, 0.03125
  %v1341 = vmul.f32 %v1278, 0.03125
  %v1342 = vmul.f32 %v1284, 0.03125
  %v1343 = vmul.f32 %v1290, 0.03125
  %v1344 = vmul.f32 %v1296, 0.03125
  %v1345 = vmul.f32 %v1302, 0.03125
  %v1346 = vmul.f32 %v1308, 0.03125
  %v1347 = vmul.f32 %v1314, 0.03125
  %v1348 = vmul.f32 %v1320, 0.03125
  %v1349 = vmul.f32 %v1326, 0.03125
  %v1350 = vmul.f32 %v1332, 0.03125
  %v1351 = vsub.f32 %v17, %v1335
  %v1352 = vsub.f32 %v18, %v1336
  %v1353 = vsub.f32 %v19, %v1337
  %v1354 = vsub.f32 %v20, %v1338
  %v1355 = vsub.f32 %v21, %v1339
  %v1356 = vsub.f32 %v22, %v1340
  %v1357 = vsub.f32 %v23, %v1341
  %v1358 = vsub.f32 %v24, %v1342
  %v1359 = vsub.f32 %v25, %v1343
  %v1360 = vsub.f32 %v26, %v1344
  %v1361 = vsub.f32 %v27, %v1345
  %v1362 = vsub.f32 %v28, %v1346
  %v1363 = vsub.f32 %v29, %v1347
  %v1364 = vsub.f32 %v30, %v1348
  %v1365 = vsub.f32 %v31, %v1349
  %v1366 = vsub.f32 %v32, %v1350
  %v1367 = vmul.f32 %v1351, %v1351
  %v1368 = vmul.f32 %v1352, %v1352
  %v1369 = vmul.f32 %v1353, %v1353
  %v1370 = vmul.f32 %v1354, %v1354
  %v1371 = vmul.f32 %v1355, %v1355
  %v1372 = vmul.f32 %v1356, %v1356
  %v1373 = vmul.f32 %v1357, %v1357
  %v1374 = vmul.f32 %v1358, %v1358
  %v1375 = vmul.f32 %v1359, %v1359
  %v1376 = vmul.f32 %v1360, %v1360
  %v1377 = vmul.f32 %v1361, %v1361
  %v1378 = vmul.f32 %v1362, %v1362
  %v1379 = vmul.f32 %v1363, %v1363
  %v1380 = vmul.f32 %v1364, %v1364
  %v1381 = vmul.f32 %v1365, %v1365
  %v1382 = vmul.f32 %v1366, %v1366
  %1383 = vmatprep.subr.mxu0 0.0
  %v1384 = vand.u32 %v33, 4294901760
  %1385 = vmatpush1.msra.mxu0 %v1384
  %1386 = vmatprep.subr.mxu0 0.0
  %v1387 = vand.u32 %v34, 4294901760
  %1388 = vmatpush1.msra.mxu0 %v1387
  %1389 = vmatprep.subr.mxu0 0.0
  %v1390 = vand.u32 %v35, 4294901760
  %1391 = vmatpush1.msra.mxu0 %v1390
  %1392 = vmatprep.subr.mxu0 0.0
  %v1393 = vand.u32 %v36, 4294901760
  %1394 = vmatpush1.msra.mxu0 %v1393
  %1395 = vmatprep.subr.mxu0 0.0
  %v1396 = vand.u32 %v37, 4294901760
  %1397 = vmatpush1.msra.mxu0 %v1396
  %1398 = vmatprep.subr.mxu0 0.0
  %v1399 = vand.u32 %v38, 4294901760
  %1400 = vmatpush1.msra.mxu0 %v1399
  %1401 = vmatprep.subr.mxu0 0.0
  %v1402 = vand.u32 %v39, 4294901760
  %1403 = vmatpush1.msra.mxu0 %v1402
  %1404 = vmatprep.subr.mxu0 0.0
  %v1405 = vand.u32 %v40, 4294901760
  %1406 = vmatpush1.msra.mxu0 %v1405
  %1407 = vmatprep.subr.mxu0 0.0
  %v1408 = vand.u32 %v41, 4294901760
  %1409 = vmatpush1.msra.mxu0 %v1408
  %1410 = vmatprep.subr.mxu0 0.0
  %v1411 = vand.u32 %v42, 4294901760
  %1412 = vmatpush1.msra.mxu0 %v1411
  %1413 = vmatprep.subr.mxu0 0.0
  %v1414 = vand.u32 %v43, 4294901760
  %1415 = vmatpush1.msra.mxu0 %v1414
  %1416 = vmatprep.subr.mxu0 0.0
  %v1417 = vand.u32 %v44, 4294901760
  %1418 = vmatpush1.msra.mxu0 %v1417
  %1419 = vmatprep.subr.mxu0 0.0
  %v1420 = vand.u32 %v45, 4294901760
  %1421 = vmatpush1.msra.mxu0 %v1420
  %1422 = vmatprep.subr.mxu0 0.0
  %v1423 = vand.u32 %v46, 4294901760
  %1424 = vmatpush1.msra.mxu0 %v1423
  %1425 = vmatprep.subr.mxu0 0.0
  %v1426 = vand.u32 %v47, 4294901760
  %1427 = vmatpush1.msra.mxu0 %v1426
  %1428 = vmatprep.subr.mxu0 0.0
  %v1429 = vand.u32 %v48, 4294901760
  %1430 = vmatpush1.msra.mxu0 %v1429
  %1431 = vmatprep.subr.mxu0 0.0
  %1432 = vmatpush1.msra.mxu0 0.0
  %1433 = vmatprep.subr.mxu0 0.0
  %1434 = vmatpush1.msra.mxu0 0.0
  %1435 = vmatprep.subr.mxu0 0.0
  %1436 = vmatpush1.msra.mxu0 0.0
  %1437 = vmatprep.subr.mxu0 0.0
  %1438 = vmatpush1.msra.mxu0 0.0
  %1439 = vmatprep.subr.mxu0 0.0
  %1440 = vmatpush1.msra.mxu0 0.0
  %1441 = vmatprep.subr.mxu0 0.0
  %1442 = vmatpush1.msra.mxu0 0.0
  %1443 = vmatprep.subr.mxu0 0.0
  %1444 = vmatpush1.msra.mxu0 0.0
  %1445 = vmatprep.subr.mxu0 0.0
  %1446 = vmatpush1.msra.mxu0 0.0
  %1447 = vmatprep.subr.mxu0 0.0
  %1448 = vmatpush1.msra.mxu0 0.0
  %1449 = vmatprep.subr.mxu0 0.0
  %1450 = vmatpush1.msra.mxu0 0.0
  %1451 = vmatprep.subr.mxu0 0.0
  %1452 = vmatpush1.msra.mxu0 0.0
  %1453 = vmatprep.subr.mxu0 0.0
  %1454 = vmatpush1.msra.mxu0 0.0
  %1455 = vmatprep.subr.mxu0 0.0
  %1456 = vmatpush1.msra.mxu0 0.0
  %1457 = vmatprep.subr.mxu0 0.0
  %1458 = vmatpush1.msra.mxu0 0.0
  %1459 = vmatprep.subr.mxu0 0.0
  %1460 = vmatpush1.msra.mxu0 0.0
  %1461 = vmatprep.subr.mxu0 0.0
  %1462 = vmatpush1.msra.mxu0 0.0
  %1463 = vmatprep.mubr.f32.mxu0 0.0
  %v1464 = vand.u32 %v1367, 4294901760
  %v1465 = vsub.f32 %v1367, %v1464
  %v1466 = vand.u32 %v1465, 4294901760
  %v1467 = vsub.f32 %v1465, %v1466
  %v1468 = vand.u32 %v1467, 4294901760
  %1469 = vmatmul.mubr.f32.gmra.mrb[0].mxu0 %v1468
  %v1470 = vpop.f32.mrb[0].mxu0
  %v1471 = vadd.f32 0.0, %v1470
  %v1472 = vpop.f32.mrb[0].mxu0
  %1473 = vmatprep.mubr.f32.mxu0 0.0
  %v1474 = vand.u32 %v1368, 4294901760
  %v1475 = vsub.f32 %v1368, %v1474
  %v1476 = vand.u32 %v1475, 4294901760
  %v1477 = vsub.f32 %v1475, %v1476
  %v1478 = vand.u32 %v1477, 4294901760
  %1479 = vmatmul.mubr.f32.gmra.mrb[0].mxu0 %v1478
  %v1480 = vpop.f32.mrb[0].mxu0
  %v1481 = vadd.f32 0.0, %v1480
  %v1482 = vpop.f32.mrb[0].mxu0
  %1483 = vmatprep.mubr.f32.mxu0 0.0
  %v1484 = vand.u32 %v1369, 4294901760
  %v1485 = vsub.f32 %v1369, %v1484
  %v1486 = vand.u32 %v1485, 4294901760
  %v1487 = vsub.f32 %v1485, %v1486
  %v1488 = vand.u32 %v1487, 4294901760
  %1489 = vmatmul.mubr.f32.gmra.mrb[0].mxu0 %v1488
  %v1490 = vpop.f32.mrb[0].mxu0
  %v1491 = vadd.f32 0.0, %v1490
  %v1492 = vpop.f32.mrb[0].mxu0
  %1493 = vmatprep.mubr.f32.mxu0 0.0
  %v1494 = vand.u32 %v1370, 4294901760
  %v1495 = vsub.f32 %v1370, %v1494
  %v1496 = vand.u32 %v1495, 4294901760
  %v1497 = vsub.f32 %v1495, %v1496
  %v1498 = vand.u32 %v1497, 4294901760
  %1499 = vmatmul.mubr.f32.gmra.mrb[0].mxu0 %v1498
  %v1500 = vpop.f32.mrb[0].mxu0
  %v1501 = vadd.f32 0.0, %v1500
  %v1502 = vpop.f32.mrb[0].mxu0
  %1503 = vmatprep.mubr.f32.mxu0 0.0
  %v1504 = vand.u32 %v1371, 4294901760
  %v1505 = vsub.f32 %v1371, %v1504
  %v1506 = vand.u32 %v1505, 4294901760
  %v1507 = vsub.f32 %v1505, %v1506
  %v1508 = vand.u32 %v1507, 4294901760
  %1509 = vmatmul.mubr.f32.gmra.mrb[0].mxu0 %v1508
  %v1510 = vpop.f32.mrb[0].mxu0
  %v1511 = vadd.f32 0.0, %v1510
  %v1512 = vpop.f32.mrb[0].mxu0
  %1513 = vmatprep.mubr.f32.mxu0 0.0
  %v1514 = vand.u32 %v1372, 4294901760
  %v1515 = vsub.f32 %v1372, %v1514
  %v1516 = vand.u32 %v1515, 4294901760
  %v1517 = vsub.f32 %v1515, %v1516
  %v1518 = vand.u32 %v1517, 4294901760
  %1519 = vmatmul.mubr.f32.gmra.mrb[0].mxu0 %v1518
  %v1520 = vpop.f32.mrb[0].mxu0
  %v1521 = vadd.f32 0.0, %v1520
  %v1522 = vpop.f32.mrb[0].mxu0
  %1523 = vmatprep.mubr.f32.mxu0 0.0
  %v1524 = vand.u32 %v1373, 4294901760
  %v1525 = vsub.f32 %v1373, %v1524
  %v1526 = vand.u32 %v1525, 4294901760
  %v1527 = vsub.f32 %v1525, %v1526
  %v1528 = vand.u32 %v1527, 4294901760
  %1529 = vmatmul.mubr.f32.gmra.mrb[0].mxu0 %v1528
  %v1530 = vpop.f32.mrb[0].mxu0
  %v1531 = vadd.f32 0.0, %v1530
  %v1532 = vpop.f32.mrb[0].mxu0
  %1533 = vmatprep.mubr.f32.mxu0 0.0
  %v1534 = vand.u32 %v1374, 4294901760
  %v1535 = vsub.f32 %v1374, %v1534
  %v1536 = vand.u32 %v1535, 4294901760
  %v1537 = vsub.f32 %v1535, %v1536
  %v1538 = vand.u32 %v1537, 4294901760
  %1539 = vmatmul.mubr.f32.gmra.mrb[0].mxu0 %v1538
  %v1540 = vpop.f32.mrb[0].mxu0
  %v1541 = vadd.f32 0.0, %v1540
  %v1542 = vpop.f32.mrb[0].mxu0
  %1543 = vmatprep.mubr.f32.mxu0 0.0
  %v1544 = vand.u32 %v1375, 4294901760
  %v1545 = vsub.f32 %v1375, %v1544
  %v1546 = vand.u32 %v1545, 4294901760
  %v1547 = vsub.f32 %v1545, %v1546
  %v1548 = vand.u32 %v1547, 4294901760
  %1549 = vmatmul.mubr.f32.gmra.mrb[0].mxu0 %v1548
  %v1550 = vpop.f32.mrb[0].mxu0
  %v1551 = vadd.f32 0.0, %v1550
  %v1552 = vpop.f32.mrb[0].mxu0
  %1553 = vmatprep.mubr.f32.mxu0 0.0
  %v1554 = vand.u32 %v1376, 4294901760
  %v1555 = vsub.f32 %v1376, %v1554
  %v1556 = vand.u32 %v1555, 4294901760
  %v1557 = vsub.f32 %v1555, %v1556
  %v1558 = vand.u32 %v1557, 4294901760
  %1559 = vmatmul.mubr.f32.gmra.mrb[0].mxu0 %v1558
  %v1560 = vpop.f32.mrb[0].mxu0
  %v1561 = vadd.f32 0.0, %v1560
  %v1562 = vpop.f32.mrb[0].mxu0
  %1563 = vmatprep.mubr.f32.mxu0 0.0
  %v1564 = vand.u32 %v1377, 4294901760
  %v1565 = vsub.f32 %v1377, %v1564
  %v1566 = vand.u32 %v1565, 4294901760
  %v1567 = vsub.f32 %v1565, %v1566
  %v1568 = vand.u32 %v1567, 4294901760
  %1569 = vmatmul.mubr.f32.gmra.mrb[0].mxu0 %v1568
  %v1570 = vpop.f32.mrb[0].mxu0
  %v1571 = vadd.f32 0.0, %v1570
  %v1572 = vpop.f32.mrb[0].mxu0
  %1573 = vmatprep.mubr.f32.mxu0 0.0
  %v1574 = vand.u32 %v1378, 4294901760
  %v1575 = vsub.f32 %v1378, %v1574
  %v1576 = vand.u32 %v1575, 4294901760
  %v1577 = vsub.f32 %v1575, %v1576
  %v1578 = vand.u32 %v1577, 4294901760
  %1579 = vmatmul.mubr.f32.gmra.mrb[0].mxu0 %v1578
  %v1580 = vpop.f32.mrb[0].mxu0
  %v1581 = vadd.f32 0.0, %v1580
  %v1582 = vpop.f32.mrb[0].mxu0
  %1583 = vmatprep.mubr.f32.mxu0 0.0
  %v1584 = vand.u32 %v1379, 4294901760
  %v1585 = vsub.f32 %v1379, %v1584
  %v1586 = vand.u32 %v1585, 4294901760
  %v1587 = vsub.f32 %v1585, %v1586
  %v1588 = vand.u32 %v1587, 4294901760
  %1589 = vmatmul.mubr.f32.gmra.mrb[0].mxu0 %v1588
  %v1590 = vpop.f32.mrb[0].mxu0
  %v1591 = vadd.f32 0.0, %v1590
  %v1592 = vpop.f32.mrb[0].mxu0
  %1593 = vmatprep.mubr.f32.mxu0 0.0
  %v1594 = vand.u32 %v1380, 4294901760
  %v1595 = vsub.f32 %v1380, %v1594
  %v1596 = vand.u32 %v1595, 4294901760
  %v1597 = vsub.f32 %v1595, %v1596
  %v1598 = vand.u32 %v1597, 4294901760
  %1599 = vmatmul.mubr.f32.gmra.mrb[0].mxu0 %v1598
  %v1600 = vpop.f32.mrb[0].mxu0
  %v1601 = vadd.f32 0.0, %v1600
  %v1602 = vpop.f32.mrb[0].mxu0
  %1603 = vmatprep.mubr.f32.mxu0 0.0
  %v1604 = vand.u32 %v1381, 4294901760
  %v1605 = vsub.f32 %v1381, %v1604
  %v1606 = vand.u32 %v1605, 4294901760
  %v1607 = vsub.f32 %v1605, %v1606
  %v1608 = vand.u32 %v1607, 4294901760
  %1609 = vmatmul.mubr.f32.gmra.mrb[0].mxu0 %v1608
  %v1610 = vpop.f32.mrb[0].mxu0
  %v1611 = vadd.f32 0.0, %v1610
  %v1612 = vpop.f32.mrb[0].mxu0
  %1613 = vmatprep.mubr.f32.mxu0 0.0
  %v1614 = vand.u32 %v1382, 4294901760
  %v1615 = vsub.f32 %v1382, %v1614
  %v1616 = vand.u32 %v1615, 4294901760
  %v1617 = vsub.f32 %v1615, %v1616
  %v1618 = vand.u32 %v1617, 4294901760
  %1619 = vmatmul.mubr.f32.gmra.mrb[0].mxu0 %v1618
  %v1620 = vpop.f32.mrb[0].mxu0
  %v1621 = vadd.f32 0.0, %v1620
  %v1622 = vpop.f32.mrb[0].mxu0
  %1623 = vdwg.mxu0
  %1624 = vmatprep.subr.mxu0 0.0
  %v1625 = vand.u32 %v33, 4294901760
  %v1626 = vsub.f32 %v33, %v1625
  %v1627 = vand.u32 %v1626, 4294901760
  %v1628 = vsub.f32 %v1626, %v1627
  %v1629 = vand.u32 %v1628, 4294901760
  %1630 = vmatpush1.msra.mxu0 %v1629
  %1631 = vmatprep.subr.mxu0 0.0
  %v1632 = vand.u32 %v34, 4294901760
  %v1633 = vsub.f32 %v34, %v1632
  %v1634 = vand.u32 %v1633, 4294901760
  %v1635 = vsub.f32 %v1633, %v1634
  %v1636 = vand.u32 %v1635, 4294901760
  %1637 = vmatpush1.msra.mxu0 %v1636
  %1638 = vmatprep.subr.mxu0 0.0
  %v1639 = vand.u32 %v35, 4294901760
  %v1640 = vsub.f32 %v35, %v1639
  %v1641 = vand.u32 %v1640, 4294901760
  %v1642 = vsub.f32 %v1640, %v1641
  %v1643 = vand.u32 %v1642, 4294901760
  %1644 = vmatpush1.msra.mxu0 %v1643
  %1645 = vmatprep.subr.mxu0 0.0
  %v1646 = vand.u32 %v36, 4294901760
  %v1647 = vsub.f32 %v36, %v1646
  %v1648 = vand.u32 %v1647, 4294901760
  %v1649 = vsub.f32 %v1647, %v1648
  %v1650 = vand.u32 %v1649, 4294901760
  %1651 = vmatpush1.msra.mxu0 %v1650
  %1652 = vmatprep.subr.mxu0 0.0
  %v1653 = vand.u32 %v37, 4294901760
  %v1654 = vsub.f32 %v37, %v1653
  %v1655 = vand.u32 %v1654, 4294901760
  %v1656 = vsub.f32 %v1654, %v1655
  %v1657 = vand.u32 %v1656, 4294901760
  %1658 = vmatpush1.msra.mxu0 %v1657
  %1659 = vmatprep.subr.mxu0 0.0
  %v1660 = vand.u32 %v38, 4294901760
  %v1661 = vsub.f32 %v38, %v1660
  %v1662 = vand.u32 %v1661, 4294901760
  %v1663 = vsub.f32 %v1661, %v1662
  %v1664 = vand.u32 %v1663, 4294901760
  %1665 = vmatpush1.msra.mxu0 %v1664
  %1666 = vmatprep.subr.mxu0 0.0
  %v1667 = vand.u32 %v39, 4294901760
  %v1668 = vsub.f32 %v39, %v1667
  %v1669 = vand.u32 %v1668, 4294901760
  %v1670 = vsub.f32 %v1668, %v1669
  %v1671 = vand.u32 %v1670, 4294901760
  %1672 = vmatpush1.msra.mxu0 %v1671
  %1673 = vmatprep.subr.mxu0 0.0
  %v1674 = vand.u32 %v40, 4294901760
  %v1675 = vsub.f32 %v40, %v1674
  %v1676 = vand.u32 %v1675, 4294901760
  %v1677 = vsub.f32 %v1675, %v1676
  %v1678 = vand.u32 %v1677, 4294901760
  %1679 = vmatpush1.msra.mxu0 %v1678
  %1680 = vmatprep.subr.mxu0 0.0
  %v1681 = vand.u32 %v41, 4294901760
  %v1682 = vsub.f32 %v41, %v1681
  %v1683 = vand.u32 %v1682, 4294901760
  %v1684 = vsub.f32 %v1682, %v1683
  %v1685 = vand.u32 %v1684, 4294901760
  %1686 = vmatpush1.msra.mxu0 %v1685
  %1687 = vmatprep.subr.mxu0 0.0
  %v1688 = vand.u32 %v42, 4294901760
  %v1689 = vsub.f32 %v42, %v1688
  %v1690 = vand.u32 %v1689, 4294901760
  %v1691 = vsub.f32 %v1689, %v1690
  %v1692 = vand.u32 %v1691, 4294901760
  %1693 = vmatpush1.msra.mxu0 %v1692
  %1694 = vmatprep.subr.mxu0 0.0
  %v1695 = vand.u32 %v43, 4294901760
  %v1696 = vsub.f32 %v43, %v1695
  %v1697 = vand.u32 %v1696, 4294901760
  %v1698 = vsub.f32 %v1696, %v1697
  %v1699 = vand.u32 %v1698, 4294901760
  %1700 = vmatpush1.msra.mxu0 %v1699
  %1701 = vmatprep.subr.mxu0 0.0
  %v1702 = vand.u32 %v44, 4294901760
  %v1703 = vsub.f32 %v44, %v1702
  %v1704 = vand.u32 %v1703, 4294901760
  %v1705 = vsub.f32 %v1703, %v1704
  %v1706 = vand.u32 %v1705, 4294901760
  %1707 = vmatpush1.msra.mxu0 %v1706
  %1708 = vmatprep.subr.mxu0 0.0
  %v1709 = vand.u32 %v45, 4294901760
  %v1710 = vsub.f32 %v45, %v1709
  %v1711 = vand.u32 %v1710, 4294901760
  %v1712 = vsub.f32 %v1710, %v1711
  %v1713 = vand.u32 %v1712, 4294901760
  %1714 = vmatpush1.msra.mxu0 %v1713
  %1715 = vmatprep.subr.mxu0 0.0
  %v1716 = vand.u32 %v46, 4294901760
  %v1717 = vsub.f32 %v46, %v1716
  %v1718 = vand.u32 %v1717, 4294901760
  %v1719 = vsub.f32 %v1717, %v1718
  %v1720 = vand.u32 %v1719, 4294901760
  %1721 = vmatpush1.msra.mxu0 %v1720
  %1722 = vmatprep.subr.mxu0 0.0
  %v1723 = vand.u32 %v47, 4294901760
  %v1724 = vsub.f32 %v47, %v1723
  %v1725 = vand.u32 %v1724, 4294901760
  %v1726 = vsub.f32 %v1724, %v1725
  %v1727 = vand.u32 %v1726, 4294901760
  %1728 = vmatpush1.msra.mxu0 %v1727
  %1729 = vmatprep.subr.mxu0 0.0
  %v1730 = vand.u32 %v48, 4294901760
  %v1731 = vsub.f32 %v48, %v1730
  %v1732 = vand.u32 %v1731, 4294901760
  %v1733 = vsub.f32 %v1731, %v1732
  %v1734 = vand.u32 %v1733, 4294901760
  %1735 = vmatpush1.msra.mxu0 %v1734
  %1736 = vmatprep.subr.mxu0 0.0
  %1737 = vmatpush1.msra.mxu0 0.0
  %1738 = vmatprep.subr.mxu0 0.0
  %1739 = vmatpush1.msra.mxu0 0.0
  %1740 = vmatprep.subr.mxu0 0.0
  %1741 = vmatpush1.msra.mxu0 0.0
  %1742 = vmatprep.subr.mxu0 0.0
  %1743 = vmatpush1.msra.mxu0 0.0
  %1744 = vmatprep.subr.mxu0 0.0
  %1745 = vmatpush1.msra.mxu0 0.0
  %1746 = vmatprep.subr.mxu0 0.0
  %1747 = vmatpush1.msra.mxu0 0.0
  %1748 = vmatprep.subr.mxu0 0.0
  %1749 = vmatpush1.msra.mxu0 0.0
  %1750 = vmatprep.subr.mxu0 0.0
  %1751 = vmatpush1.msra.mxu0 0.0
  %1752 = vmatprep.subr.mxu0 0.0
  %1753 = vmatpush1.msra.mxu0 0.0
  %1754 = vmatprep.subr.mxu0 0.0
  %1755 = vmatpush1.msra.mxu0 0.0
  %1756 = vmatprep.subr.mxu0 0.0
  %1757 = vmatpush1.msra.mxu0 0.0
  %1758 = vmatprep.subr.mxu0 0.0
  %1759 = vmatpush1.msra.mxu0 0.0
  %1760 = vmatprep.subr.mxu0 0.0
  %1761 = vmatpush1.msra.mxu0 0.0
  %1762 = vmatprep.subr.mxu0 0.0
  %1763 = vmatpush1.msra.mxu0 0.0
  %1764 = vmatprep.subr.mxu0 0.0
  %1765 = vmatpush1.msra.mxu0 0.0
  %1766 = vmatprep.subr.mxu0 0.0
  %1767 = vmatpush1.msra.mxu0 0.0
  %1768 = vmatprep.mubr.f32.mxu0 0.0
  %v1769 = vand.u32 %v1367, 4294901760
  %1770 = vmatmul.mubr.f32.gmra.mrb[0].mxu0 %v1769
  %v1771 = vpop.f32.mrb[0].mxu0
  %v1772 = vadd.f32 %v1471, %v1771
  %v1773 = vpop.f32.mrb[0].mxu0
  %1774 = vmatprep.mubr.f32.mxu0 0.0
  %v1775 = vand.u32 %v1368, 4294901760
  %1776 = vmatmul.mubr.f32.gmra.mrb[0].mxu0 %v1775
  %v1777 = vpop.f32.mrb[0].mxu0
  %v1778 = vadd.f32 %v1481, %v1777
  %v1779 = vpop.f32.mrb[0].mxu0
  %1780 = vmatprep.mubr.f32.mxu0 0.0
  %v1781 = vand.u32 %v1369, 4294901760
  %1782 = vmatmul.mubr.f32.gmra.mrb[0].mxu0 %v1781
  %v1783 = vpop.f32.mrb[0].mxu0
  %v1784 = vadd.f32 %v1491, %v1783
  %v1785 = vpop.f32.mrb[0].mxu0
  %1786 = vmatprep.mubr.f32.mxu0 0.0
  %v1787 = vand.u32 %v1370, 4294901760
  %1788 = vmatmul.mubr.f32.gmra.mrb[0].mxu0 %v1787
  %v1789 = vpop.f32.mrb[0].mxu0
  %v1790 = vadd.f32 %v1501, %v1789
  %v1791 = vpop.f32.mrb[0].mxu0
  %1792 = vmatprep.mubr.f32.mxu0 0.0
  %v1793 = vand.u32 %v1371, 4294901760
  %1794 = vmatmul.mubr.f32.gmra.mrb[0].mxu0 %v1793
  %v1795 = vpop.f32.mrb[0].mxu0
  %v1796 = vadd.f32 %v1511, %v1795
  %v1797 = vpop.f32.mrb[0].mxu0
  %1798 = vmatprep.mubr.f32.mxu0 0.0
  %v1799 = vand.u32 %v1372, 4294901760
  %1800 = vmatmul.mubr.f32.gmra.mrb[0].mxu0 %v1799
  %v1801 = vpop.f32.mrb[0].mxu0
  %v1802 = vadd.f32 %v1521, %v1801
  %v1803 = vpop.f32.mrb[0].mxu0
  %1804 = vmatprep.mubr.f32.mxu0 0.0
  %v1805 = vand.u32 %v1373, 4294901760
  %1806 = vmatmul.mubr.f32.gmra.mrb[0].mxu0 %v1805
  %v1807 = vpop.f32.mrb[0].mxu0
  %v1808 = vadd.f32 %v1531, %v1807
  %v1809 = vpop.f32.mrb[0].mxu0
  %1810 = vmatprep.mubr.f32.mxu0 0.0
  %v1811 = vand.u32 %v1374, 4294901760
  %1812 = vmatmul.mubr.f32.gmra.mrb[0].mxu0 %v1811
  %v1813 = vpop.f32.mrb[0].mxu0
  %v1814 = vadd.f32 %v1541, %v1813
  %v1815 = vpop.f32.mrb[0].mxu0
  %1816 = vmatprep.mubr.f32.mxu0 0.0
  %v1817 = vand.u32 %v1375, 4294901760
  %1818 = vmatmul.mubr.f32.gmra.mrb[0].mxu0 %v1817
  %v1819 = vpop.f32.mrb[0].mxu0
  %v1820 = vadd.f32 %v1551, %v1819
  %v1821 = vpop.f32.mrb[0].mxu0
  %1822 = vmatprep.mubr.f32.mxu0 0.0
  %v1823 = vand.u32 %v1376, 4294901760
  %1824 = vmatmul.mubr.f32.gmra.mrb[0].mxu0 %v1823
  %v1825 = vpop.f32.mrb[0].mxu0
  %v1826 = vadd.f32 %v1561, %v1825
  %v1827 = vpop.f32.mrb[0].mxu0
  %1828 = vmatprep.mubr.f32.mxu0 0.0
  %v1829 = vand.u32 %v1377, 4294901760
  %1830 = vmatmul.mubr.f32.gmra.mrb[0].mxu0 %v1829
  %v1831 = vpop.f32.mrb[0].mxu0
  %v1832 = vadd.f32 %v1571, %v1831
  %v1833 = vpop.f32.mrb[0].mxu0
  %1834 = vmatprep.mubr.f32.mxu0 0.0
  %v1835 = vand.u32 %v1378, 4294901760
  %1836 = vmatmul.mubr.f32.gmra.mrb[0].mxu0 %v1835
  %v1837 = vpop.f32.mrb[0].mxu0
  %v1838 = vadd.f32 %v1581, %v1837
  %v1839 = vpop.f32.mrb[0].mxu0
  %1840 = vmatprep.mubr.f32.mxu0 0.0
  %v1841 = vand.u32 %v1379, 4294901760
  %1842 = vmatmul.mubr.f32.gmra.mrb[0].mxu0 %v1841
  %v1843 = vpop.f32.mrb[0].mxu0
  %v1844 = vadd.f32 %v1591, %v1843
  %v1845 = vpop.f32.mrb[0].mxu0
  %1846 = vmatprep.mubr.f32.mxu0 0.0
  %v1847 = vand.u32 %v1380, 4294901760
  %1848 = vmatmul.mubr.f32.gmra.mrb[0].mxu0 %v1847
  %v1849 = vpop.f32.mrb[0].mxu0
  %v1850 = vadd.f32 %v1601, %v1849
  %v1851 = vpop.f32.mrb[0].mxu0
  %1852 = vmatprep.mubr.f32.mxu0 0.0
  %v1853 = vand.u32 %v1381, 4294901760
  %1854 = vmatmul.mubr.f32.gmra.mrb[0].mxu0 %v1853
  %v1855 = vpop.f32.mrb[0].mxu0
  %v1856 = vadd.f32 %v1611, %v1855
  %v1857 = vpop.f32.mrb[0].mxu0
  %1858 = vmatprep.mubr.f32.mxu0 0.0
  %v1859 = vand.u32 %v1382, 4294901760
  %1860 = vmatmul.mubr.f32.gmra.mrb[0].mxu0 %v1859
  %v1861 = vpop.f32.mrb[0].mxu0
  %v1862 = vadd.f32 %v1621, %v1861
  %v1863 = vpop.f32.mrb[0].mxu0
  %1864 = vdwg.mxu0
  %1865 = vmatprep.subr.mxu0 0.0
  %v1866 = vand.u32 %v33, 4294901760
  %v1867 = vsub.f32 %v33, %v1866
  %1868 = vmatpush1.msra.mxu0 %v1867
  %1869 = vmatprep.subr.mxu0 0.0
  %v1870 = vand.u32 %v34, 4294901760
  %v1871 = vsub.f32 %v34, %v1870
  %1872 = vmatpush1.msra.mxu0 %v1871
  %1873 = vmatprep.subr.mxu0 0.0
  %v1874 = vand.u32 %v35, 4294901760
  %v1875 = vsub.f32 %v35, %v1874
  %1876 = vmatpush1.msra.mxu0 %v1875
  %1877 = vmatprep.subr.mxu0 0.0
  %v1878 = vand.u32 %v36, 4294901760
  %v1879 = vsub.f32 %v36, %v1878
  %1880 = vmatpush1.msra.mxu0 %v1879
  %1881 = vmatprep.subr.mxu0 0.0
  %v1882 = vand.u32 %v37, 4294901760
  %v1883 = vsub.f32 %v37, %v1882
  %1884 = vmatpush1.msra.mxu0 %v1883
  %1885 = vmatprep.subr.mxu0 0.0
  %v1886 = vand.u32 %v38, 4294901760
  %v1887 = vsub.f32 %v38, %v1886
  %1888 = vmatpush1.msra.mxu0 %v1887
  %1889 = vmatprep.subr.mxu0 0.0
  %v1890 = vand.u32 %v39, 4294901760
  %v1891 = vsub.f32 %v39, %v1890
  %1892 = vmatpush1.msra.mxu0 %v1891
  %1893 = vmatprep.subr.mxu0 0.0
  %v1894 = vand.u32 %v40, 4294901760
  %v1895 = vsub.f32 %v40, %v1894
  %1896 = vmatpush1.msra.mxu0 %v1895
  %1897 = vmatprep.subr.mxu0 0.0
  %v1898 = vand.u32 %v41, 4294901760
  %v1899 = vsub.f32 %v41, %v1898
  %1900 = vmatpush1.msra.mxu0 %v1899
  %1901 = vmatprep.subr.mxu0 0.0
  %v1902 = vand.u32 %v42, 4294901760
  %v1903 = vsub.f32 %v42, %v1902
  %1904 = vmatpush1.msra.mxu0 %v1903
  %1905 = vmatprep.subr.mxu0 0.0
  %v1906 = vand.u32 %v43, 4294901760
  %v1907 = vsub.f32 %v43, %v1906
  %1908 = vmatpush1.msra.mxu0 %v1907
  %1909 = vmatprep.subr.mxu0 0.0
  %v1910 = vand.u32 %v44, 4294901760
  %v1911 = vsub.f32 %v44, %v1910
  %1912 = vmatpush1.msra.mxu0 %v1911
  %1913 = vmatprep.subr.mxu0 0.0
  %v1914 = vand.u32 %v45, 4294901760
  %v1915 = vsub.f32 %v45, %v1914
  %1916 = vmatpush1.msra.mxu0 %v1915
  %1917 = vmatprep.subr.mxu0 0.0
  %v1918 = vand.u32 %v46, 4294901760
  %v1919 = vsub.f32 %v46, %v1918
  %1920 = vmatpush1.msra.mxu0 %v1919
  %1921 = vmatprep.subr.mxu0 0.0
  %v1922 = vand.u32 %v47, 4294901760
  %v1923 = vsub.f32 %v47, %v1922
  %1924 = vmatpush1.msra.mxu0 %v1923
  %1925 = vmatprep.subr.mxu0 0.0
  %v1926 = vand.u32 %v48, 4294901760
  %v1927 = vsub.f32 %v48, %v1926
  %1928 = vmatpush1.msra.mxu0 %v1927
  %1929 = vmatprep.subr.mxu0 0.0
  %1930 = vmatpush1.msra.mxu0 0.0
  %1931 = vmatprep.subr.mxu0 0.0
  %1932 = vmatpush1.msra.mxu0 0.0
  %1933 = vmatprep.subr.mxu0 0.0
  %1934 = vmatpush1.msra.mxu0 0.0
  %1935 = vmatprep.subr.mxu0 0.0
  %1936 = vmatpush1.msra.mxu0 0.0
  %1937 = vmatprep.subr.mxu0 0.0
  %1938 = vmatpush1.msra.mxu0 0.0
  %1939 = vmatprep.subr.mxu0 0.0
  %1940 = vmatpush1.msra.mxu0 0.0
  %1941 = vmatprep.subr.mxu0 0.0
  %1942 = vmatpush1.msra.mxu0 0.0
  %1943 = vmatprep.subr.mxu0 0.0
  %1944 = vmatpush1.msra.mxu0 0.0
  %1945 = vmatprep.subr.mxu0 0.0
  %1946 = vmatpush1.msra.mxu0 0.0
  %1947 = vmatprep.subr.mxu0 0.0
  %1948 = vmatpush1.msra.mxu0 0.0
  %1949 = vmatprep.subr.mxu0 0.0
  %1950 = vmatpush1.msra.mxu0 0.0
  %1951 = vmatprep.subr.mxu0 0.0
  %1952 = vmatpush1.msra.mxu0 0.0
  %1953 = vmatprep.subr.mxu0 0.0
  %1954 = vmatpush1.msra.mxu0 0.0
  %1955 = vmatprep.subr.mxu0 0.0
  %1956 = vmatpush1.msra.mxu0 0.0
  %1957 = vmatprep.subr.mxu0 0.0
  %1958 = vmatpush1.msra.mxu0 0.0
  %1959 = vmatprep.subr.mxu0 0.0
  %1960 = vmatpush1.msra.mxu0 0.0
  %1961 = vmatprep.mubr.f32.mxu0 0.0
  %v1962 = vand.u32 %v1367, 4294901760
  %v1963 = vsub.f32 %v1367, %v1962
  %1964 = vmatmul.mubr.f32.gmra.mrb[0].mxu0 %v1963
  %v1965 = vpop.f32.mrb[0].mxu0
  %v1966 = vadd.f32 %v1772, %v1965
  %v1967 = vpop.f32.mrb[0].mxu0
  %1968 = vmatprep.mubr.f32.mxu0 0.0
  %v1969 = vand.u32 %v1368, 4294901760
  %v1970 = vsub.f32 %v1368, %v1969
  %1971 = vmatmul.mubr.f32.gmra.mrb[0].mxu0 %v1970
  %v1972 = vpop.f32.mrb[0].mxu0
  %v1973 = vadd.f32 %v1778, %v1972
  %v1974 = vpop.f32.mrb[0].mxu0
  %1975 = vmatprep.mubr.f32.mxu0 0.0
  %v1976 = vand.u32 %v1369, 4294901760
  %v1977 = vsub.f32 %v1369, %v1976
  %1978 = vmatmul.mubr.f32.gmra.mrb[0].mxu0 %v1977
  %v1979 = vpop.f32.mrb[0].mxu0
  %v1980 = vadd.f32 %v1784, %v1979
  %v1981 = vpop.f32.mrb[0].mxu0
  %1982 = vmatprep.mubr.f32.mxu0 0.0
  %v1983 = vand.u32 %v1370, 4294901760
  %v1984 = vsub.f32 %v1370, %v1983
  %1985 = vmatmul.mubr.f32.gmra.mrb[0].mxu0 %v1984
  %v1986 = vpop.f32.mrb[0].mxu0
  %v1987 = vadd.f32 %v1790, %v1986
  %v1988 = vpop.f32.mrb[0].mxu0
  %1989 = vmatprep.mubr.f32.mxu0 0.0
  %v1990 = vand.u32 %v1371, 4294901760
  %v1991 = vsub.f32 %v1371, %v1990
  %1992 = vmatmul.mubr.f32.gmra.mrb[0].mxu0 %v1991
  %v1993 = vpop.f32.mrb[0].mxu0
  %v1994 = vadd.f32 %v1796, %v1993
  %v1995 = vpop.f32.mrb[0].mxu0
  %1996 = vmatprep.mubr.f32.mxu0 0.0
  %v1997 = vand.u32 %v1372, 4294901760
  %v1998 = vsub.f32 %v1372, %v1997
  %1999 = vmatmul.mubr.f32.gmra.mrb[0].mxu0 %v1998
  %v2000 = vpop.f32.mrb[0].mxu0
  %v2001 = vadd.f32 %v1802, %v2000
  %v2002 = vpop.f32.mrb[0].mxu0
  %2003 = vmatprep.mubr.f32.mxu0 0.0
  %v2004 = vand.u32 %v1373, 4294901760
  %v2005 = vsub.f32 %v1373, %v2004
  %2006 = vmatmul.mubr.f32.gmra.mrb[0].mxu0 %v2005
  %v2007 = vpop.f32.mrb[0].mxu0
  %v2008 = vadd.f32 %v1808, %v2007
  %v2009 = vpop.f32.mrb[0].mxu0
  %2010 = vmatprep.mubr.f32.mxu0 0.0
  %v2011 = vand.u32 %v1374, 4294901760
  %v2012 = vsub.f32 %v1374, %v2011
  %2013 = vmatmul.mubr.f32.gmra.mrb[0].mxu0 %v2012
  %v2014 = vpop.f32.mrb[0].mxu0
  %v2015 = vadd.f32 %v1814, %v2014
  %v2016 = vpop.f32.mrb[0].mxu0
  %2017 = vmatprep.mubr.f32.mxu0 0.0
  %v2018 = vand.u32 %v1375, 4294901760
  %v2019 = vsub.f32 %v1375, %v2018
  %2020 = vmatmul.mubr.f32.gmra.mrb[0].mxu0 %v2019
  %v2021 = vpop.f32.mrb[0].mxu0
  %v2022 = vadd.f32 %v1820, %v2021
  %v2023 = vpop.f32.mrb[0].mxu0
  %2024 = vmatprep.mubr.f32.mxu0 0.0
  %v2025 = vand.u32 %v1376, 4294901760
  %v2026 = vsub.f32 %v1376, %v2025
  %2027 = vmatmul.mubr.f32.gmra.mrb[0].mxu0 %v2026
  %v2028 = vpop.f32.mrb[0].mxu0
  %v2029 = vadd.f32 %v1826, %v2028
  %v2030 = vpop.f32.mrb[0].mxu0
  %2031 = vmatprep.mubr.f32.mxu0 0.0
  %v2032 = vand.u32 %v1377, 4294901760
  %v2033 = vsub.f32 %v1377, %v2032
  %2034 = vmatmul.mubr.f32.gmra.mrb[0].mxu0 %v2033
  %v2035 = vpop.f32.mrb[0].mxu0
  %v2036 = vadd.f32 %v1832, %v2035
  %v2037 = vpop.f32.mrb[0].mxu0
  %2038 = vmatprep.mubr.f32.mxu0 0.0
  %v2039 = vand.u32 %v1378, 4294901760
  %v2040 = vsub.f32 %v1378, %v2039
  %2041 = vmatmul.mubr.f32.gmra.mrb[0].mxu0 %v2040
  %v2042 = vpop.f32.mrb[0].mxu0
  %v2043 = vadd.f32 %v1838, %v2042
  %v2044 = vpop.f32.mrb[0].mxu0
  %2045 = vmatprep.mubr.f32.mxu0 0.0
  %v2046 = vand.u32 %v1379, 4294901760
  %v2047 = vsub.f32 %v1379, %v2046
  %2048 = vmatmul.mubr.f32.gmra.mrb[0].mxu0 %v2047
  %v2049 = vpop.f32.mrb[0].mxu0
  %v2050 = vadd.f32 %v1844, %v2049
  %v2051 = vpop.f32.mrb[0].mxu0
  %2052 = vmatprep.mubr.f32.mxu0 0.0
  %v2053 = vand.u32 %v1380, 4294901760
  %v2054 = vsub.f32 %v1380, %v2053
  %2055 = vmatmul.mubr.f32.gmra.mrb[0].mxu0 %v2054
  %v2056 = vpop.f32.mrb[0].mxu0
  %v2057 = vadd.f32 %v1850, %v2056
  %v2058 = vpop.f32.mrb[0].mxu0
  %2059 = vmatprep.mubr.f32.mxu0 0.0
  %v2060 = vand.u32 %v1381, 4294901760
  %v2061 = vsub.f32 %v1381, %v2060
  %2062 = vmatmul.mubr.f32.gmra.mrb[0].mxu0 %v2061
  %v2063 = vpop.f32.mrb[0].mxu0
  %v2064 = vadd.f32 %v1856, %v2063
  %v2065 = vpop.f32.mrb[0].mxu0
  %2066 = vmatprep.mubr.f32.mxu0 0.0
  %v2067 = vand.u32 %v1382, 4294901760
  %v2068 = vsub.f32 %v1382, %v2067
  %2069 = vmatmul.mubr.f32.gmra.mrb[0].mxu0 %v2068
  %v2070 = vpop.f32.mrb[0].mxu0
  %v2071 = vadd.f32 %v1862, %v2070
  %v2072 = vpop.f32.mrb[0].mxu0
  %2073 = vdwg.mxu0
  %2074 = vmatprep.subr.mxu0 0.0
  %v2075 = vand.u32 %v33, 4294901760
  %2076 = vmatpush1.msra.mxu0 %v2075
  %2077 = vmatprep.subr.mxu0 0.0
  %v2078 = vand.u32 %v34, 4294901760
  %2079 = vmatpush1.msra.mxu0 %v2078
  %2080 = vmatprep.subr.mxu0 0.0
  %v2081 = vand.u32 %v35, 4294901760
  %2082 = vmatpush1.msra.mxu0 %v2081
  %2083 = vmatprep.subr.mxu0 0.0
  %v2084 = vand.u32 %v36, 4294901760
  %2085 = vmatpush1.msra.mxu0 %v2084
  %2086 = vmatprep.subr.mxu0 0.0
  %v2087 = vand.u32 %v37, 4294901760
  %2088 = vmatpush1.msra.mxu0 %v2087
  %2089 = vmatprep.subr.mxu0 0.0
  %v2090 = vand.u32 %v38, 4294901760
  %2091 = vmatpush1.msra.mxu0 %v2090
  %2092 = vmatprep.subr.mxu0 0.0
  %v2093 = vand.u32 %v39, 4294901760
  %2094 = vmatpush1.msra.mxu0 %v2093
  %2095 = vmatprep.subr.mxu0 0.0
  %v2096 = vand.u32 %v40, 4294901760
  %2097 = vmatpush1.msra.mxu0 %v2096
  %2098 = vmatprep.subr.mxu0 0.0
  %v2099 = vand.u32 %v41, 4294901760
  %2100 = vmatpush1.msra.mxu0 %v2099
  %2101 = vmatprep.subr.mxu0 0.0
  %v2102 = vand.u32 %v42, 4294901760
  %2103 = vmatpush1.msra.mxu0 %v2102
  %2104 = vmatprep.subr.mxu0 0.0
  %v2105 = vand.u32 %v43, 4294901760
  %2106 = vmatpush1.msra.mxu0 %v2105
  %2107 = vmatprep.subr.mxu0 0.0
  %v2108 = vand.u32 %v44, 4294901760
  %2109 = vmatpush1.msra.mxu0 %v2108
  %2110 = vmatprep.subr.mxu0 0.0
  %v2111 = vand.u32 %v45, 4294901760
  %2112 = vmatpush1.msra.mxu0 %v2111
  %2113 = vmatprep.subr.mxu0 0.0
  %v2114 = vand.u32 %v46, 4294901760
  %2115 = vmatpush1.msra.mxu0 %v2114
  %2116 = vmatprep.subr.mxu0 0.0
  %v2117 = vand.u32 %v47, 4294901760
  %2118 = vmatpush1.msra.mxu0 %v2117
  %2119 = vmatprep.subr.mxu0 0.0
  %v2120 = vand.u32 %v48, 4294901760
  %2121 = vmatpush1.msra.mxu0 %v2120
  %2122 = vmatprep.subr.mxu0 0.0
  %2123 = vmatpush1.msra.mxu0 0.0
  %2124 = vmatprep.subr.mxu0 0.0
  %2125 = vmatpush1.msra.mxu0 0.0
  %2126 = vmatprep.subr.mxu0 0.0
  %2127 = vmatpush1.msra.mxu0 0.0
  %2128 = vmatprep.subr.mxu0 0.0
  %2129 = vmatpush1.msra.mxu0 0.0
  %2130 = vmatprep.subr.mxu0 0.0
  %2131 = vmatpush1.msra.mxu0 0.0
  %2132 = vmatprep.subr.mxu0 0.0
  %2133 = vmatpush1.msra.mxu0 0.0
  %2134 = vmatprep.subr.mxu0 0.0
  %2135 = vmatpush1.msra.mxu0 0.0
  %2136 = vmatprep.subr.mxu0 0.0
  %2137 = vmatpush1.msra.mxu0 0.0
  %2138 = vmatprep.subr.mxu0 0.0
  %2139 = vmatpush1.msra.mxu0 0.0
  %2140 = vmatprep.subr.mxu0 0.0
  %2141 = vmatpush1.msra.mxu0 0.0
  %2142 = vmatprep.subr.mxu0 0.0
  %2143 = vmatpush1.msra.mxu0 0.0
  %2144 = vmatprep.subr.mxu0 0.0
  %2145 = vmatpush1.msra.mxu0 0.0
  %2146 = vmatprep.subr.mxu0 0.0
  %2147 = vmatpush1.msra.mxu0 0.0
  %2148 = vmatprep.subr.mxu0 0.0
  %2149 = vmatpush1.msra.mxu0 0.0
  %2150 = vmatprep.subr.mxu0 0.0
  %2151 = vmatpush1.msra.mxu0 0.0
  %2152 = vmatprep.subr.mxu0 0.0
  %2153 = vmatpush1.msra.mxu0 0.0
  %2154 = vmatprep.mubr.f32.mxu0 0.0
  %v2155 = vand.u32 %v1367, 4294901760
  %v2156 = vsub.f32 %v1367, %v2155
  %v2157 = vand.u32 %v2156, 4294901760
  %2158 = vmatmul.mubr.f32.gmra.mrb[0].mxu0 %v2157
  %v2159 = vpop.f32.mrb[0].mxu0
  %v2160 = vadd.f32 %v1966, %v2159
  %v2161 = vpop.f32.mrb[0].mxu0
  %2162 = vmatprep.mubr.f32.mxu0 0.0
  %v2163 = vand.u32 %v1368, 4294901760
  %v2164 = vsub.f32 %v1368, %v2163
  %v2165 = vand.u32 %v2164, 4294901760
  %2166 = vmatmul.mubr.f32.gmra.mrb[0].mxu0 %v2165
  %v2167 = vpop.f32.mrb[0].mxu0
  %v2168 = vadd.f32 %v1973, %v2167
  %v2169 = vpop.f32.mrb[0].mxu0
  %2170 = vmatprep.mubr.f32.mxu0 0.0
  %v2171 = vand.u32 %v1369, 4294901760
  %v2172 = vsub.f32 %v1369, %v2171
  %v2173 = vand.u32 %v2172, 4294901760
  %2174 = vmatmul.mubr.f32.gmra.mrb[0].mxu0 %v2173
  %v2175 = vpop.f32.mrb[0].mxu0
  %v2176 = vadd.f32 %v1980, %v2175
  %v2177 = vpop.f32.mrb[0].mxu0
  %2178 = vmatprep.mubr.f32.mxu0 0.0
  %v2179 = vand.u32 %v1370, 4294901760
  %v2180 = vsub.f32 %v1370, %v2179
  %v2181 = vand.u32 %v2180, 4294901760
  %2182 = vmatmul.mubr.f32.gmra.mrb[0].mxu0 %v2181
  %v2183 = vpop.f32.mrb[0].mxu0
  %v2184 = vadd.f32 %v1987, %v2183
  %v2185 = vpop.f32.mrb[0].mxu0
  %2186 = vmatprep.mubr.f32.mxu0 0.0
  %v2187 = vand.u32 %v1371, 4294901760
  %v2188 = vsub.f32 %v1371, %v2187
  %v2189 = vand.u32 %v2188, 4294901760
  %2190 = vmatmul.mubr.f32.gmra.mrb[0].mxu0 %v2189
  %v2191 = vpop.f32.mrb[0].mxu0
  %v2192 = vadd.f32 %v1994, %v2191
  %v2193 = vpop.f32.mrb[0].mxu0
  %2194 = vmatprep.mubr.f32.mxu0 0.0
  %v2195 = vand.u32 %v1372, 4294901760
  %v2196 = vsub.f32 %v1372, %v2195
  %v2197 = vand.u32 %v2196, 4294901760
  %2198 = vmatmul.mubr.f32.gmra.mrb[0].mxu0 %v2197
  %v2199 = vpop.f32.mrb[0].mxu0
  %v2200 = vadd.f32 %v2001, %v2199
  %v2201 = vpop.f32.mrb[0].mxu0
  %2202 = vmatprep.mubr.f32.mxu0 0.0
  %v2203 = vand.u32 %v1373, 4294901760
  %v2204 = vsub.f32 %v1373, %v2203
  %v2205 = vand.u32 %v2204, 4294901760
  %2206 = vmatmul.mubr.f32.gmra.mrb[0].mxu0 %v2205
  %v2207 = vpop.f32.mrb[0].mxu0
  %v2208 = vadd.f32 %v2008, %v2207
  %v2209 = vpop.f32.mrb[0].mxu0
  %2210 = vmatprep.mubr.f32.mxu0 0.0
  %v2211 = vand.u32 %v1374, 4294901760
  %v2212 = vsub.f32 %v1374, %v2211
  %v2213 = vand.u32 %v2212, 4294901760
  %2214 = vmatmul.mubr.f32.gmra.mrb[0].mxu0 %v2213
  %v2215 = vpop.f32.mrb[0].mxu0
  %v2216 = vadd.f32 %v2015, %v2215
  %v2217 = vpop.f32.mrb[0].mxu0
  %2218 = vmatprep.mubr.f32.mxu0 0.0
  %v2219 = vand.u32 %v1375, 4294901760
  %v2220 = vsub.f32 %v1375, %v2219
  %v2221 = vand.u32 %v2220, 4294901760
  %2222 = vmatmul.mubr.f32.gmra.mrb[0].mxu0 %v2221
  %v2223 = vpop.f32.mrb[0].mxu0
  %v2224 = vadd.f32 %v2022, %v2223
  %v2225 = vpop.f32.mrb[0].mxu0
  %2226 = vmatprep.mubr.f32.mxu0 0.0
  %v2227 = vand.u32 %v1376, 4294901760
  %v2228 = vsub.f32 %v1376, %v2227
  %v2229 = vand.u32 %v2228, 4294901760
  %2230 = vmatmul.mubr.f32.gmra.mrb[0].mxu0 %v2229
  %v2231 = vpop.f32.mrb[0].mxu0
  %v2232 = vadd.f32 %v2029, %v2231
  %v2233 = vpop.f32.mrb[0].mxu0
  %2234 = vmatprep.mubr.f32.mxu0 0.0
  %v2235 = vand.u32 %v1377, 4294901760
  %v2236 = vsub.f32 %v1377, %v2235
  %v2237 = vand.u32 %v2236, 4294901760
  %2238 = vmatmul.mubr.f32.gmra.mrb[0].mxu0 %v2237
  %v2239 = vpop.f32.mrb[0].mxu0
  %v2240 = vadd.f32 %v2036, %v2239
  %v2241 = vpop.f32.mrb[0].mxu0
  %2242 = vmatprep.mubr.f32.mxu0 0.0
  %v2243 = vand.u32 %v1378, 4294901760
  %v2244 = vsub.f32 %v1378, %v2243
  %v2245 = vand.u32 %v2244, 4294901760
  %2246 = vmatmul.mubr.f32.gmra.mrb[0].mxu0 %v2245
  %v2247 = vpop.f32.mrb[0].mxu0
  %v2248 = vadd.f32 %v2043, %v2247
  %v2249 = vpop.f32.mrb[0].mxu0
  %2250 = vmatprep.mubr.f32.mxu0 0.0
  %v2251 = vand.u32 %v1379, 4294901760
  %v2252 = vsub.f32 %v1379, %v2251
  %v2253 = vand.u32 %v2252, 4294901760
  %2254 = vmatmul.mubr.f32.gmra.mrb[0].mxu0 %v2253
  %v2255 = vpop.f32.mrb[0].mxu0
  %v2256 = vadd.f32 %v2050, %v2255
  %v2257 = vpop.f32.mrb[0].mxu0
  %2258 = vmatprep.mubr.f32.mxu0 0.0
  %v2259 = vand.u32 %v1380, 4294901760
  %v2260 = vsub.f32 %v1380, %v2259
  %v2261 = vand.u32 %v2260, 4294901760
  %2262 = vmatmul.mubr.f32.gmra.mrb[0].mxu0 %v2261
  %v2263 = vpop.f32.mrb[0].mxu0
  %v2264 = vadd.f32 %v2057, %v2263
  %v2265 = vpop.f32.mrb[0].mxu0
  %2266 = vmatprep.mubr.f32.mxu0 0.0
  %v2267 = vand.u32 %v1381, 4294901760
  %v2268 = vsub.f32 %v1381, %v2267
  %v2269 = vand.u32 %v2268, 4294901760
  %2270 = vmatmul.mubr.f32.gmra.mrb[0].mxu0 %v2269
  %v2271 = vpop.f32.mrb[0].mxu0
  %v2272 = vadd.f32 %v2064, %v2271
  %v2273 = vpop.f32.mrb[0].mxu0
  %2274 = vmatprep.mubr.f32.mxu0 0.0
  %v2275 = vand.u32 %v1382, 4294901760
  %v2276 = vsub.f32 %v1382, %v2275
  %v2277 = vand.u32 %v2276, 4294901760
  %2278 = vmatmul.mubr.f32.gmra.mrb[0].mxu0 %v2277
  %v2279 = vpop.f32.mrb[0].mxu0
  %v2280 = vadd.f32 %v2071, %v2279
  %v2281 = vpop.f32.mrb[0].mxu0
  %2282 = vdwg.mxu0
  %2283 = vmatprep.subr.mxu0 0.0
  %v2284 = vand.u32 %v33, 4294901760
  %v2285 = vsub.f32 %v33, %v2284
  %v2286 = vand.u32 %v2285, 4294901760
  %2287 = vmatpush1.msra.mxu0 %v2286
  %2288 = vmatprep.subr.mxu0 0.0
  %v2289 = vand.u32 %v34, 4294901760
  %v2290 = vsub.f32 %v34, %v2289
  %v2291 = vand.u32 %v2290, 4294901760
  %2292 = vmatpush1.msra.mxu0 %v2291
  %2293 = vmatprep.subr.mxu0 0.0
  %v2294 = vand.u32 %v35, 4294901760
  %v2295 = vsub.f32 %v35, %v2294
  %v2296 = vand.u32 %v2295, 4294901760
  %2297 = vmatpush1.msra.mxu0 %v2296
  %2298 = vmatprep.subr.mxu0 0.0
  %v2299 = vand.u32 %v36, 4294901760
  %v2300 = vsub.f32 %v36, %v2299
  %v2301 = vand.u32 %v2300, 4294901760
  %2302 = vmatpush1.msra.mxu0 %v2301
  %2303 = vmatprep.subr.mxu0 0.0
  %v2304 = vand.u32 %v37, 4294901760
  %v2305 = vsub.f32 %v37, %v2304
  %v2306 = vand.u32 %v2305, 4294901760
  %2307 = vmatpush1.msra.mxu0 %v2306
  %2308 = vmatprep.subr.mxu0 0.0
  %v2309 = vand.u32 %v38, 4294901760
  %v2310 = vsub.f32 %v38, %v2309
  %v2311 = vand.u32 %v2310, 4294901760
  %2312 = vmatpush1.msra.mxu0 %v2311
  %2313 = vmatprep.subr.mxu0 0.0
  %v2314 = vand.u32 %v39, 4294901760
  %v2315 = vsub.f32 %v39, %v2314
  %v2316 = vand.u32 %v2315, 4294901760
  %2317 = vmatpush1.msra.mxu0 %v2316
  %2318 = vmatprep.subr.mxu0 0.0
  %v2319 = vand.u32 %v40, 4294901760
  %v2320 = vsub.f32 %v40, %v2319
  %v2321 = vand.u32 %v2320, 4294901760
  %2322 = vmatpush1.msra.mxu0 %v2321
  %2323 = vmatprep.subr.mxu0 0.0
  %v2324 = vand.u32 %v41, 4294901760
  %v2325 = vsub.f32 %v41, %v2324
  %v2326 = vand.u32 %v2325, 4294901760
  %2327 = vmatpush1.msra.mxu0 %v2326
  %2328 = vmatprep.subr.mxu0 0.0
  %v2329 = vand.u32 %v42, 4294901760
  %v2330 = vsub.f32 %v42, %v2329
  %v2331 = vand.u32 %v2330, 4294901760
  %2332 = vmatpush1.msra.mxu0 %v2331
  %2333 = vmatprep.subr.mxu0 0.0
  %v2334 = vand.u32 %v43, 4294901760
  %v2335 = vsub.f32 %v43, %v2334
  %v2336 = vand.u32 %v2335, 4294901760
  %2337 = vmatpush1.msra.mxu0 %v2336
  %2338 = vmatprep.subr.mxu0 0.0
  %v2339 = vand.u32 %v44, 4294901760
  %v2340 = vsub.f32 %v44, %v2339
  %v2341 = vand.u32 %v2340, 4294901760
  %2342 = vmatpush1.msra.mxu0 %v2341
  %2343 = vmatprep.subr.mxu0 0.0
  %v2344 = vand.u32 %v45, 4294901760
  %v2345 = vsub.f32 %v45, %v2344
  %v2346 = vand.u32 %v2345, 4294901760
  %2347 = vmatpush1.msra.mxu0 %v2346
  %2348 = vmatprep.subr.mxu0 0.0
  %v2349 = vand.u32 %v46, 4294901760
  %v2350 = vsub.f32 %v46, %v2349
  %v2351 = vand.u32 %v2350, 4294901760
  %2352 = vmatpush1.msra.mxu0 %v2351
  %2353 = vmatprep.subr.mxu0 0.0
  %v2354 = vand.u32 %v47, 4294901760
  %v2355 = vsub.f32 %v47, %v2354
  %v2356 = vand.u32 %v2355, 4294901760
  %2357 = vmatpush1.msra.mxu0 %v2356
  %2358 = vmatprep.subr.mxu0 0.0
  %v2359 = vand.u32 %v48, 4294901760
  %v2360 = vsub.f32 %v48, %v2359
  %v2361 = vand.u32 %v2360, 4294901760
  %2362 = vmatpush1.msra.mxu0 %v2361
  %2363 = vmatprep.subr.mxu0 0.0
  %2364 = vmatpush1.msra.mxu0 0.0
  %2365 = vmatprep.subr.mxu0 0.0
  %2366 = vmatpush1.msra.mxu0 0.0
  %2367 = vmatprep.subr.mxu0 0.0
  %2368 = vmatpush1.msra.mxu0 0.0
  %2369 = vmatprep.subr.mxu0 0.0
  %2370 = vmatpush1.msra.mxu0 0.0
  %2371 = vmatprep.subr.mxu0 0.0
  %2372 = vmatpush1.msra.mxu0 0.0
  %2373 = vmatprep.subr.mxu0 0.0
  %2374 = vmatpush1.msra.mxu0 0.0
  %2375 = vmatprep.subr.mxu0 0.0
  %2376 = vmatpush1.msra.mxu0 0.0
  %2377 = vmatprep.subr.mxu0 0.0
  %2378 = vmatpush1.msra.mxu0 0.0
  %2379 = vmatprep.subr.mxu0 0.0
  %2380 = vmatpush1.msra.mxu0 0.0
  %2381 = vmatprep.subr.mxu0 0.0
  %2382 = vmatpush1.msra.mxu0 0.0
  %2383 = vmatprep.subr.mxu0 0.0
  %2384 = vmatpush1.msra.mxu0 0.0
  %2385 = vmatprep.subr.mxu0 0.0
  %2386 = vmatpush1.msra.mxu0 0.0
  %2387 = vmatprep.subr.mxu0 0.0
  %2388 = vmatpush1.msra.mxu0 0.0
  %2389 = vmatprep.subr.mxu0 0.0
  %2390 = vmatpush1.msra.mxu0 0.0
  %2391 = vmatprep.subr.mxu0 0.0
  %2392 = vmatpush1.msra.mxu0 0.0
  %2393 = vmatprep.subr.mxu0 0.0
  %2394 = vmatpush1.msra.mxu0 0.0
  %2395 = vmatprep.mubr.f32.mxu0 0.0
  %v2396 = vand.u32 %v1367, 4294901760
  %2397 = vmatmul.mubr.f32.gmra.mrb[0].mxu0 %v2396
  %v2398 = vpop.f32.mrb[0].mxu0
  %v2399 = vadd.f32 %v2160, %v2398
  %v2400 = vpop.f32.mrb[0].mxu0
  %2401 = vmatprep.mubr.f32.mxu0 0.0
  %v2402 = vand.u32 %v1368, 4294901760
  %2403 = vmatmul.mubr.f32.gmra.mrb[0].mxu0 %v2402
  %v2404 = vpop.f32.mrb[0].mxu0
  %v2405 = vadd.f32 %v2168, %v2404
  %v2406 = vpop.f32.mrb[0].mxu0
  %2407 = vmatprep.mubr.f32.mxu0 0.0
  %v2408 = vand.u32 %v1369, 4294901760
  %2409 = vmatmul.mubr.f32.gmra.mrb[0].mxu0 %v2408
  %v2410 = vpop.f32.mrb[0].mxu0
  %v2411 = vadd.f32 %v2176, %v2410
  %v2412 = vpop.f32.mrb[0].mxu0
  %2413 = vmatprep.mubr.f32.mxu0 0.0
  %v2414 = vand.u32 %v1370, 4294901760
  %2415 = vmatmul.mubr.f32.gmra.mrb[0].mxu0 %v2414
  %v2416 = vpop.f32.mrb[0].mxu0
  %v2417 = vadd.f32 %v2184, %v2416
  %v2418 = vpop.f32.mrb[0].mxu0
  %2419 = vmatprep.mubr.f32.mxu0 0.0
  %v2420 = vand.u32 %v1371, 4294901760
  %2421 = vmatmul.mubr.f32.gmra.mrb[0].mxu0 %v2420
  %v2422 = vpop.f32.mrb[0].mxu0
  %v2423 = vadd.f32 %v2192, %v2422
  %v2424 = vpop.f32.mrb[0].mxu0
  %2425 = vmatprep.mubr.f32.mxu0 0.0
  %v2426 = vand.u32 %v1372, 4294901760
  %2427 = vmatmul.mubr.f32.gmra.mrb[0].mxu0 %v2426
  %v2428 = vpop.f32.mrb[0].mxu0
  %v2429 = vadd.f32 %v2200, %v2428
  %v2430 = vpop.f32.mrb[0].mxu0
  %2431 = vmatprep.mubr.f32.mxu0 0.0
  %v2432 = vand.u32 %v1373, 4294901760
  %2433 = vmatmul.mubr.f32.gmra.mrb[0].mxu0 %v2432
  %v2434 = vpop.f32.mrb[0].mxu0
  %v2435 = vadd.f32 %v2208, %v2434
  %v2436 = vpop.f32.mrb[0].mxu0
  %2437 = vmatprep.mubr.f32.mxu0 0.0
  %v2438 = vand.u32 %v1374, 4294901760
  %2439 = vmatmul.mubr.f32.gmra.mrb[0].mxu0 %v2438
  %v2440 = vpop.f32.mrb[0].mxu0
  %v2441 = vadd.f32 %v2216, %v2440
  %v2442 = vpop.f32.mrb[0].mxu0
  %2443 = vmatprep.mubr.f32.mxu0 0.0
  %v2444 = vand.u32 %v1375, 4294901760
  %2445 = vmatmul.mubr.f32.gmra.mrb[0].mxu0 %v2444
  %v2446 = vpop.f32.mrb[0].mxu0
  %v2447 = vadd.f32 %v2224, %v2446
  %v2448 = vpop.f32.mrb[0].mxu0
  %2449 = vmatprep.mubr.f32.mxu0 0.0
  %v2450 = vand.u32 %v1376, 4294901760
  %2451 = vmatmul.mubr.f32.gmra.mrb[0].mxu0 %v2450
  %v2452 = vpop.f32.mrb[0].mxu0
  %v2453 = vadd.f32 %v2232, %v2452
  %v2454 = vpop.f32.mrb[0].mxu0
  %2455 = vmatprep.mubr.f32.mxu0 0.0
  %v2456 = vand.u32 %v1377, 4294901760
  %2457 = vmatmul.mubr.f32.gmra.mrb[0].mxu0 %v2456
  %v2458 = vpop.f32.mrb[0].mxu0
  %v2459 = vadd.f32 %v2240, %v2458
  %v2460 = vpop.f32.mrb[0].mxu0
  %2461 = vmatprep.mubr.f32.mxu0 0.0
  %v2462 = vand.u32 %v1378, 4294901760
  %2463 = vmatmul.mubr.f32.gmra.mrb[0].mxu0 %v2462
  %v2464 = vpop.f32.mrb[0].mxu0
  %v2465 = vadd.f32 %v2248, %v2464
  %v2466 = vpop.f32.mrb[0].mxu0
  %2467 = vmatprep.mubr.f32.mxu0 0.0
  %v2468 = vand.u32 %v1379, 4294901760
  %2469 = vmatmul.mubr.f32.gmra.mrb[0].mxu0 %v2468
  %v2470 = vpop.f32.mrb[0].mxu0
  %v2471 = vadd.f32 %v2256, %v2470
  %v2472 = vpop.f32.mrb[0].mxu0
  %2473 = vmatprep.mubr.f32.mxu0 0.0
  %v2474 = vand.u32 %v1380, 4294901760
  %2475 = vmatmul.mubr.f32.gmra.mrb[0].mxu0 %v2474
  %v2476 = vpop.f32.mrb[0].mxu0
  %v2477 = vadd.f32 %v2264, %v2476
  %v2478 = vpop.f32.mrb[0].mxu0
  %2479 = vmatprep.mubr.f32.mxu0 0.0
  %v2480 = vand.u32 %v1381, 4294901760
  %2481 = vmatmul.mubr.f32.gmra.mrb[0].mxu0 %v2480
  %v2482 = vpop.f32.mrb[0].mxu0
  %v2483 = vadd.f32 %v2272, %v2482
  %v2484 = vpop.f32.mrb[0].mxu0
  %2485 = vmatprep.mubr.f32.mxu0 0.0
  %v2486 = vand.u32 %v1382, 4294901760
  %2487 = vmatmul.mubr.f32.gmra.mrb[0].mxu0 %v2486
  %v2488 = vpop.f32.mrb[0].mxu0
  %v2489 = vadd.f32 %v2280, %v2488
  %v2490 = vpop.f32.mrb[0].mxu0
  %2491 = vdwg.mxu0
  %2492 = vmatprep.subr.mxu0 0.0
  %v2493 = vand.u32 %v33, 4294901760
  %2494 = vmatpush1.msra.mxu0 %v2493
  %2495 = vmatprep.subr.mxu0 0.0
  %v2496 = vand.u32 %v34, 4294901760
  %2497 = vmatpush1.msra.mxu0 %v2496
  %2498 = vmatprep.subr.mxu0 0.0
  %v2499 = vand.u32 %v35, 4294901760
  %2500 = vmatpush1.msra.mxu0 %v2499
  %2501 = vmatprep.subr.mxu0 0.0
  %v2502 = vand.u32 %v36, 4294901760
  %2503 = vmatpush1.msra.mxu0 %v2502
  %2504 = vmatprep.subr.mxu0 0.0
  %v2505 = vand.u32 %v37, 4294901760
  %2506 = vmatpush1.msra.mxu0 %v2505
  %2507 = vmatprep.subr.mxu0 0.0
  %v2508 = vand.u32 %v38, 4294901760
  %2509 = vmatpush1.msra.mxu0 %v2508
  %2510 = vmatprep.subr.mxu0 0.0
  %v2511 = vand.u32 %v39, 4294901760
  %2512 = vmatpush1.msra.mxu0 %v2511
  %2513 = vmatprep.subr.mxu0 0.0
  %v2514 = vand.u32 %v40, 4294901760
  %2515 = vmatpush1.msra.mxu0 %v2514
  %2516 = vmatprep.subr.mxu0 0.0
  %v2517 = vand.u32 %v41, 4294901760
  %2518 = vmatpush1.msra.mxu0 %v2517
  %2519 = vmatprep.subr.mxu0 0.0
  %v2520 = vand.u32 %v42, 4294901760
  %2521 = vmatpush1.msra.mxu0 %v2520
  %2522 = vmatprep.subr.mxu0 0.0
  %v2523 = vand.u32 %v43, 4294901760
  %2524 = vmatpush1.msra.mxu0 %v2523
  %2525 = vmatprep.subr.mxu0 0.0
  %v2526 = vand.u32 %v44, 4294901760
  %2527 = vmatpush1.msra.mxu0 %v2526
  %2528 = vmatprep.subr.mxu0 0.0
  %v2529 = vand.u32 %v45, 4294901760
  %2530 = vmatpush1.msra.mxu0 %v2529
  %2531 = vmatprep.subr.mxu0 0.0
  %v2532 = vand.u32 %v46, 4294901760
  %2533 = vmatpush1.msra.mxu0 %v2532
  %2534 = vmatprep.subr.mxu0 0.0
  %v2535 = vand.u32 %v47, 4294901760
  %2536 = vmatpush1.msra.mxu0 %v2535
  %2537 = vmatprep.subr.mxu0 0.0
  %v2538 = vand.u32 %v48, 4294901760
  %2539 = vmatpush1.msra.mxu0 %v2538
  %2540 = vmatprep.subr.mxu0 0.0
  %2541 = vmatpush1.msra.mxu0 0.0
  %2542 = vmatprep.subr.mxu0 0.0
  %2543 = vmatpush1.msra.mxu0 0.0
  %2544 = vmatprep.subr.mxu0 0.0
  %2545 = vmatpush1.msra.mxu0 0.0
  %2546 = vmatprep.subr.mxu0 0.0
  %2547 = vmatpush1.msra.mxu0 0.0
  %2548 = vmatprep.subr.mxu0 0.0
  %2549 = vmatpush1.msra.mxu0 0.0
  %2550 = vmatprep.subr.mxu0 0.0
  %2551 = vmatpush1.msra.mxu0 0.0
  %2552 = vmatprep.subr.mxu0 0.0
  %2553 = vmatpush1.msra.mxu0 0.0
  %2554 = vmatprep.subr.mxu0 0.0
  %2555 = vmatpush1.msra.mxu0 0.0
  %2556 = vmatprep.subr.mxu0 0.0
  %2557 = vmatpush1.msra.mxu0 0.0
  %2558 = vmatprep.subr.mxu0 0.0
  %2559 = vmatpush1.msra.mxu0 0.0
  %2560 = vmatprep.subr.mxu0 0.0
  %2561 = vmatpush1.msra.mxu0 0.0
  %2562 = vmatprep.subr.mxu0 0.0
  %2563 = vmatpush1.msra.mxu0 0.0
  %2564 = vmatprep.subr.mxu0 0.0
  %2565 = vmatpush1.msra.mxu0 0.0
  %2566 = vmatprep.subr.mxu0 0.0
  %2567 = vmatpush1.msra.mxu0 0.0
  %2568 = vmatprep.subr.mxu0 0.0
  %2569 = vmatpush1.msra.mxu0 0.0
  %2570 = vmatprep.subr.mxu0 0.0
  %2571 = vmatpush1.msra.mxu0 0.0
  %2572 = vmatprep.mubr.f32.mxu0 0.0
  %v2573 = vand.u32 %v1367, 4294901760
  %2574 = vmatmul.mubr.f32.gmra.mrb[0].mxu0 %v2573
  %v2575 = vpop.f32.mrb[0].mxu0
  %v2576 = vadd.f32 %v2399, %v2575
  %v2577 = vpop.f32.mrb[0].mxu0
  %2578 = vmatprep.mubr.f32.mxu0 0.0
  %v2579 = vand.u32 %v1368, 4294901760
  %2580 = vmatmul.mubr.f32.gmra.mrb[0].mxu0 %v2579
  %v2581 = vpop.f32.mrb[0].mxu0
  %v2582 = vadd.f32 %v2405, %v2581
  %v2583 = vpop.f32.mrb[0].mxu0
  %2584 = vmatprep.mubr.f32.mxu0 0.0
  %v2585 = vand.u32 %v1369, 4294901760
  %2586 = vmatmul.mubr.f32.gmra.mrb[0].mxu0 %v2585
  %v2587 = vpop.f32.mrb[0].mxu0
  %v2588 = vadd.f32 %v2411, %v2587
  %v2589 = vpop.f32.mrb[0].mxu0
  %2590 = vmatprep.mubr.f32.mxu0 0.0
  %v2591 = vand.u32 %v1370, 4294901760
  %2592 = vmatmul.mubr.f32.gmra.mrb[0].mxu0 %v2591
  %v2593 = vpop.f32.mrb[0].mxu0
  %v2594 = vadd.f32 %v2417, %v2593
  %v2595 = vpop.f32.mrb[0].mxu0
  %2596 = vmatprep.mubr.f32.mxu0 0.0
  %v2597 = vand.u32 %v1371, 4294901760
  %2598 = vmatmul.mubr.f32.gmra.mrb[0].mxu0 %v2597
  %v2599 = vpop.f32.mrb[0].mxu0
  %v2600 = vadd.f32 %v2423, %v2599
  %v2601 = vpop.f32.mrb[0].mxu0
  %2602 = vmatprep.mubr.f32.mxu0 0.0
  %v2603 = vand.u32 %v1372, 4294901760
  %2604 = vmatmul.mubr.f32.gmra.mrb[0].mxu0 %v2603
  %v2605 = vpop.f32.mrb[0].mxu0
  %v2606 = vadd.f32 %v2429, %v2605
  %v2607 = vpop.f32.mrb[0].mxu0
  %2608 = vmatprep.mubr.f32.mxu0 0.0
  %v2609 = vand.u32 %v1373, 4294901760
  %2610 = vmatmul.mubr.f32.gmra.mrb[0].mxu0 %v2609
  %v2611 = vpop.f32.mrb[0].mxu0
  %v2612 = vadd.f32 %v2435, %v2611
  %v2613 = vpop.f32.mrb[0].mxu0
  %2614 = vmatprep.mubr.f32.mxu0 0.0
  %v2615 = vand.u32 %v1374, 4294901760
  %2616 = vmatmul.mubr.f32.gmra.mrb[0].mxu0 %v2615
  %v2617 = vpop.f32.mrb[0].mxu0
  %v2618 = vadd.f32 %v2441, %v2617
  %v2619 = vpop.f32.mrb[0].mxu0
  %2620 = vmatprep.mubr.f32.mxu0 0.0
  %v2621 = vand.u32 %v1375, 4294901760
  %2622 = vmatmul.mubr.f32.gmra.mrb[0].mxu0 %v2621
  %v2623 = vpop.f32.mrb[0].mxu0
  %v2624 = vadd.f32 %v2447, %v2623
  %v2625 = vpop.f32.mrb[0].mxu0
  %2626 = vmatprep.mubr.f32.mxu0 0.0
  %v2627 = vand.u32 %v1376, 4294901760
  %2628 = vmatmul.mubr.f32.gmra.mrb[0].mxu0 %v2627
  %v2629 = vpop.f32.mrb[0].mxu0
  %v2630 = vadd.f32 %v2453, %v2629
  %v2631 = vpop.f32.mrb[0].mxu0
  %2632 = vmatprep.mubr.f32.mxu0 0.0
  %v2633 = vand.u32 %v1377, 4294901760
  %2634 = vmatmul.mubr.f32.gmra.mrb[0].mxu0 %v2633
  %v2635 = vpop.f32.mrb[0].mxu0
  %v2636 = vadd.f32 %v2459, %v2635
  %v2637 = vpop.f32.mrb[0].mxu0
  %2638 = vmatprep.mubr.f32.mxu0 0.0
  %v2639 = vand.u32 %v1378, 4294901760
  %2640 = vmatmul.mubr.f32.gmra.mrb[0].mxu0 %v2639
  %v2641 = vpop.f32.mrb[0].mxu0
  %v2642 = vadd.f32 %v2465, %v2641
  %v2643 = vpop.f32.mrb[0].mxu0
  %2644 = vmatprep.mubr.f32.mxu0 0.0
  %v2645 = vand.u32 %v1379, 4294901760
  %2646 = vmatmul.mubr.f32.gmra.mrb[0].mxu0 %v2645
  %v2647 = vpop.f32.mrb[0].mxu0
  %v2648 = vadd.f32 %v2471, %v2647
  %v2649 = vpop.f32.mrb[0].mxu0
  %2650 = vmatprep.mubr.f32.mxu0 0.0
  %v2651 = vand.u32 %v1380, 4294901760
  %2652 = vmatmul.mubr.f32.gmra.mrb[0].mxu0 %v2651
  %v2653 = vpop.f32.mrb[0].mxu0
  %v2654 = vadd.f32 %v2477, %v2653
  %v2655 = vpop.f32.mrb[0].mxu0
  %2656 = vmatprep.mubr.f32.mxu0 0.0
  %v2657 = vand.u32 %v1381, 4294901760
  %2658 = vmatmul.mubr.f32.gmra.mrb[0].mxu0 %v2657
  %v2659 = vpop.f32.mrb[0].mxu0
  %v2660 = vadd.f32 %v2483, %v2659
  %v2661 = vpop.f32.mrb[0].mxu0
  %2662 = vmatprep.mubr.f32.mxu0 0.0
  %v2663 = vand.u32 %v1382, 4294901760
  %2664 = vmatmul.mubr.f32.gmra.mrb[0].mxu0 %v2663
  %v2665 = vpop.f32.mrb[0].mxu0
  %v2666 = vadd.f32 %v2489, %v2665
  %v2667 = vpop.f32.mrb[0].mxu0
  %2668 = vdwg.mxu0
  %v2669 = vmul.f32 %v2576, 0.03125
  %v2670 = vmul.f32 %v2582, 0.03125
  %v2671 = vmul.f32 %v2588, 0.03125
  %v2672 = vmul.f32 %v2594, 0.03125
  %v2673 = vmul.f32 %v2600, 0.03125
  %v2674 = vmul.f32 %v2606, 0.03125
  %v2675 = vmul.f32 %v2612, 0.03125
  %v2676 = vmul.f32 %v2618, 0.03125
  %v2677 = vmul.f32 %v2624, 0.03125
  %v2678 = vmul.f32 %v2630, 0.03125
  %v2679 = vmul.f32 %v2636, 0.03125
  %v2680 = vmul.f32 %v2642, 0.03125
  %v2681 = vmul.f32 %v2648, 0.03125
  %v2682 = vmul.f32 %v2654, 0.03125
  %v2683 = vmul.f32 %v2660, 0.03125
  %v2684 = vmul.f32 %v2666, 0.03125
  %v2685 = vadd.f32 %v2669, 1e-05
  %v2686 = vadd.f32 %v2670, 1e-05
  %v2687 = vadd.f32 %v2671, 1e-05
  %v2688 = vadd.f32 %v2672, 1e-05
  %v2689 = vadd.f32 %v2673, 1e-05
  %v2690 = vadd.f32 %v2674, 1e-05
  %v2691 = vadd.f32 %v2675, 1e-05
  %v2692 = vadd.f32 %v2676, 1e-05
  %v2693 = vadd.f32 %v2677, 1e-05
  %v2694 = vadd.f32 %v2678, 1e-05
  %v2695 = vadd.f32 %v2679, 1e-05
  %v2696 = vadd.f32 %v2680, 1e-05
  %v2697 = vadd.f32 %v2681, 1e-05
  %v2698 = vadd.f32 %v2682, 1e-05
  %v2699 = vadd.f32 %v2683, 1e-05
  %v2700 = vadd.f32 %v2684, 1e-05
  %v2701 = vrsqrt.pop %v2685
  %v2702 = vrsqrt.pop %v2686
  %v2703 = vrsqrt.pop %v2687
  %v2704 = vrsqrt.pop %v2688
  %v2705 = vrsqrt.pop %v2689
  %v2706 = vrsqrt.pop %v2690
  %v2707 = vrsqrt.pop %v2691
  %v2708 = vrsqrt.pop %v2692
  %v2709 = vrsqrt.pop %v2693
  %v2710 = vrsqrt.pop %v2694
  %v2711 = vrsqrt.pop %v2695
  %v2712 = vrsqrt.pop %v2696
  %v2713 = vrsqrt.pop %v2697
  %v2714 = vrsqrt.pop %v2698
  %v2715 = vrsqrt.pop %v2699
  %v2716 = vrsqrt.pop %v2700
  %v2717 = vmul.f32 %v1351, %v2701
  %v2718 = vmul.f32 %v1352, %v2702
  %v2719 = vmul.f32 %v1353, %v2703
  %v2720 = vmul.f32 %v1354, %v2704
  %v2721 = vmul.f32 %v1355, %v2705
  %v2722 = vmul.f32 %v1356, %v2706
  %v2723 = vmul.f32 %v1357, %v2707
  %v2724 = vmul.f32 %v1358, %v2708
  %v2725 = vmul.f32 %v1359, %v2709
  %v2726 = vmul.f32 %v1360, %v2710
  %v2727 = vmul.f32 %v1361, %v2711
  %v2728 = vmul.f32 %v1362, %v2712
  %v2729 = vmul.f32 %v1363, %v2713
  %v2730 = vmul.f32 %v1364, %v2714
  %v2731 = vmul.f32 %v1365, %v2715
  %v2732 = vmul.f32 %v1366, %v2716
  %v2733 = vld [vmem:[%s2] sm:$0x1]
  %v2735 = vlaneseq
  %v2736 = vshrl.u32 %v2735, 7
  %v2737 = vsub.s32 0, %v2736
  %v2738 = vrot.slane %v2733, %v2737
  %v2740 = vmul.f32 %v2717, %v2738
  %v2741 = vmul.f32 %v2718, %v2738
  %v2742 = vmul.f32 %v2719, %v2738
  %v2743 = vmul.f32 %v2720, %v2738
  %v2744 = vmul.f32 %v2721, %v2738
  %v2745 = vmul.f32 %v2722, %v2738
  %v2746 = vmul.f32 %v2723, %v2738
  %v2747 = vmul.f32 %v2724, %v2738
  %v2748 = vmul.f32 %v2725, %v2738
  %v2749 = vmul.f32 %v2726, %v2738
  %v2750 = vmul.f32 %v2727, %v2738
  %v2751 = vmul.f32 %v2728, %v2738
  %v2752 = vmul.f32 %v2729, %v2738
  %v2753 = vmul.f32 %v2730, %v2738
  %v2754 = vmul.f32 %v2731, %v2738
  %v2755 = vmul.f32 %v2732, %v2738
  %v2756 = vld [vmem:[%s3] sm:$0x1]
  %v2758 = vlaneseq
  %v2759 = vshrl.u32 %v2758, 7
  %v2760 = vsub.s32 0, %v2759
  %v2761 = vrot.slane %v2756, %v2760
  %v2763 = vadd.f32 %v2740, %v2761
  %v2764 = vadd.f32 %v2741, %v2761
  %v2765 = vadd.f32 %v2742, %v2761
  %v2766 = vadd.f32 %v2743, %v2761
  %v2767 = vadd.f32 %v2744, %v2761
  %v2768 = vadd.f32 %v2745, %v2761
  %v2769 = vadd.f32 %v2746, %v2761
  %v2770 = vadd.f32 %v2747, %v2761
  %v2771 = vadd.f32 %v2748, %v2761
  %v2772 = vadd.f32 %v2749, %v2761
  %v2773 = vadd.f32 %v2750, %v2761
  %v2774 = vadd.f32 %v2751, %v2761
  %v2775 = vadd.f32 %v2752, %v2761
  %v2776 = vadd.f32 %v2753, %v2761
  %v2777 = vadd.f32 %v2754, %v2761
  %v2778 = vadd.f32 %v2755, %v2761
  %2779 = vst [vmem:[%s4] sm:$0xff] %v2763
  %2780 = vst [vmem:[%s4 + $0x8] sm:$0xff] %v2764
  %2781 = vst [vmem:[%s4 + $0x10] sm:$0xff] %v2765
  %2782 = vst [vmem:[%s4 + $0x18] sm:$0xff] %v2766
  %2783 = vst [vmem:[%s4 + $0x20] sm:$0xff] %v2767
  %2784 = vst [vmem:[%s4 + $0x28] sm:$0xff] %v2768
  %2785 = vst [vmem:[%s4 + $0x30] sm:$0xff] %v2769
  %2786 = vst [vmem:[%s4 + $0x38] sm:$0xff] %v2770
  %2787 = vst [vmem:[%s4 + $0x40] sm:$0xff] %v2771
  %2788 = vst [vmem:[%s4 + $0x48] sm:$0xff] %v2772
  %2789 = vst [vmem:[%s4 + $0x50] sm:$0xff] %v2773
  %2790 = vst [vmem:[%s4 + $0x58] sm:$0xff] %v2774
  %2791 = vst [vmem:[%s4 + $0x60] sm:$0xff] %v2775
  %2792 = vst [vmem:[%s4 + $0x68] sm:$0xff] %v2776
  %2793 = vst [vmem:[%s4 + $0x70] sm:$0xff] %v2777
  %2794 = vst [vmem:[%s4 + $0x78] sm:$0xff] %v2778
  // Predicated region
  $region18: #{with_bias_layer_norm.1} parent=0 // pred_check
    _
  $region19: #{with_bias_layer_norm.1} parent=0 // pred_check_branch
    %2796 = sbr.rel (0) target = $region21
  $region20: #{with_bias_layer_norm.1} parent=0 // pred_region
    _
  $region21: #{with_bias_layer_norm.1} parent=0 // pred_fallthru
    _
  // Predicated region
  $region22: #{with_bias_layer_norm.1} parent=0 // pred_check
    _
  $region23: #{with_bias_layer_norm.1} parent=0 // pred_check_branch
    %2798 = sbr.rel (0) target = $region25
  $region24: #{with_bias_layer_norm.1} parent=0 // pred_region
    _
  $region25: #{with_bias_layer_norm.1} parent=0 // pred_fallthru
    _

</llo_original>
